<compile_context>
chip_gen: v6e
topology: v6e:2x2x1
jax: 0.10.0
libtpu: 0.0.40
codegen_flags: <defaults>
</compile_context>

<pallas_src>
import functools

import numpy as np
import jax
import jax.numpy as jnp
from jax.experimental import pallas as pl
from jax.experimental.pallas import tpu as pltpu

AWQ_REVERSE_ORDER = np.array([0, 4, 1, 5, 2, 6, 3, 7], dtype=np.int32)
BITS = 4
PACK = 32 // BITS  # 8 nibbles per int32


# ----------------------------- host-side glue (parameter prep) -----------------------------
def awq_unpack_int4(packed_i32):
    """Faithful AWQ unpack: (R, C) int32 -> (R, 8C) int32 in [0, 15], AWQ column order."""
    packed = np.asarray(packed_i32).astype(np.uint32)
    shifts = np.arange(0, 32, BITS, dtype=np.uint32)
    un = (packed[:, :, None] >> shifts[None, None, :]) & np.uint32(0xF)       # (R, C, 8)
    un = un.reshape(packed.shape[0], -1)                                      # shift order
    order = np.arange(un.shape[1]).reshape(-1, PACK)[:, AWQ_REVERSE_ORDER].reshape(-1)
    return un[:, order].astype(np.int32)                                      # AWQ order


def repack_blockwise(int4_vals, tile_n):
    """Repack (R, N) int4 values so that, *within every N-tile of width tile_n*, nibble s
    of packed column j holds local column s*(tile_n//8)+j.  The kernel then rebuilds each
    (rows, tile_n) weight tile with a plain lane-dim concat of the 8 shifted nibble planes
    (pure VPU work, no in-kernel lane interleave), and each plane stays lane-aligned."""
    R, N = int4_vals.shape
    nt = N // tile_n
    cpt = tile_n // PACK                      # packed columns per N-tile
    v = int4_vals.reshape(R, nt, PACK, cpt).astype(np.uint32)
    packed = np.zeros((R, nt, cpt), dtype=np.uint32)
    for s in range(PACK):
        packed |= v[:, :, s, :] << np.uint32(4 * s)
    return packed.reshape(R, N // PACK).view(np.int32)


def _choose_groups_per_step(n_groups, grp):
    """Quant groups per K grid step.  Targets tk ~ 1024 K-elements and keeps the
    qzeros/scales block shape legal (gpk == n_groups or a multiple of 8)."""
    target = max(1, 1024 // grp)
    if n_groups <= target:
        return n_groups
    best = None
    g = 8
    while g <= min(target, n_groups):
        if n_groups % g == 0:
            best = g
        g *= 2
    return best if best is not None else n_groups


# --------------------------------------- kernel ---------------------------------------
def _unpack_cols(packed):
    # packed: (rows, Np) int32 -> (rows, 8*Np) int32 in [0, 15]; lane concat of nibble planes.
    nibbles = [jnp.right_shift(packed, 4 * s) & 0xF for s in range(PACK)]
    return jnp.concatenate(nibbles, axis=-1)


def awq_gemm_kernel(x_ref, qw_ref, qz_ref, sc_ref, b_ref, o_ref, acc_ref, *, gpk, grp):
    k = pl.program_id(2)                                   # reduction (quant-group) axis

    @pl.when(k == 0)
    def _():
        acc_ref[...] = jnp.zeros_like(acc_ref)

    # statically unrolled loop over the quantization groups inside this K step
    for g in range(gpk):
        xg = x_ref[:, pl.ds(g * grp, grp)]                       # (tm, grp)  bf16
        w_int = _unpack_cols(qw_ref[pl.ds(g * grp, grp), :])     # (grp, tn)  int32 in [0,15]
        # zero-point / scale hoisted to the (tm, tn) output domain:
        #   x @ ((w - z) * s) == s * (x @ w - z * rowsum(x))
        p = jnp.dot(xg, w_int.astype(jnp.bfloat16),              # MXU bf16 fast path
                    preferred_element_type=jnp.float32)          # (tm, tn) f32
        rs = jnp.sum(xg.astype(jnp.float32), axis=-1, keepdims=True)   # (tm, 1)
        z = _unpack_cols(qz_ref[pl.ds(g, 1), :]).astype(jnp.float32)   # (1, tn)
        scale = sc_ref[pl.ds(g, 1), :]                                 # (1, tn) f32
        acc_ref[...] += scale * (p - z * rs)

    @pl.when(k == pl.num_programs(2) - 1)
    def _():
        o_ref[...] = (acc_ref[...] + b_ref[...]).astype(o_ref.dtype)   # bias broadcast (1, tn)


# --------------------------------------- wrapper ---------------------------------------
def wqlinear_gemm_forward(x, qweight, qzeros, scales, bias, group_size):
    in_features = qweight.shape[0]
    out_features = scales.shape[1]
    grp = in_features if group_size == -1 else group_size
    n_groups = in_features // grp

    out_shape = x.shape[:-1] + (out_features,)
    # TODO(synk): torch rounds the dequantized weight to fp16 before the f32 matmul; here the
    # matmul runs in bf16 with f32 accumulation (within the module's expected quant tolerance).
    x2d = jnp.asarray(x, jnp.bfloat16).reshape(-1, in_features)
    M = x2d.shape[0]

    # ---- tile sizing (sized for v7x's 64 MiB VMEM / 32 MiB scoped default; fits v5e/v6e) ----
    tm = max(8, min(256, ((M + 7) // 8) * 8))
    M_pad = ((M + tm - 1) // tm) * tm
    if M_pad != M:
        x2d = jnp.pad(x2d, ((0, M_pad - M), (0, 0)))

    # tn >= 1024 keeps every nibble plane >= 128 lanes; small N falls back to the full width.
    tn = 1024 if (out_features > 1024 and out_features % 1024 == 0) else out_features
    gpk = _choose_groups_per_step(n_groups, grp)           # quant groups per K grid step
    tk = gpk * grp
    Np_tile = tn // PACK

    # deterministic host-side prep (plain numpy): resolve AWQ ordering, repack per N-tile
    qw_k = jnp.asarray(repack_blockwise(awq_unpack_int4(qweight), tn))   # (K, N//8)    int32
    qz_k = jnp.asarray(repack_blockwise(awq_unpack_int4(qzeros), tn))    # (K//G, N//8) int32
    sc_f32 = jnp.asarray(scales, jnp.float32)                            # (K//G, N)
    if bias is None:
        b_f32 = jnp.zeros((1, out_features), jnp.float32)
    else:
        b_f32 = jnp.asarray(bias, jnp.float32).reshape(1, out_features)

    grid = (M_pad // tm, out_features // tn, n_groups // gpk)

    # VMEM budget for the chosen tiles (acc scratch + double-buffered in/out tiles) + headroom
    tile_bytes = (
        tm * tn * 4                    # f32 accumulator scratch
        + 2 * tm * tn * 4              # output tile (double-buffered)
        + 2 * tm * tk * 2              # x tile, bf16
        + 2 * tk * Np_tile * 4         # packed weight tile
        + 2 * gpk * Np_tile * 4        # packed zeros tile
        + 2 * gpk * tn * 4             # scales tile
        + 2 * tn * 4                   # bias tile
    )
    vmem_limit = int(min(max(2 * tile_bytes, 16 << 20), 48 << 20))

    kernel = functools.partial(awq_gemm_kernel, gpk=gpk, grp=grp)

    out2d = pl.pallas_call(
        kernel,
        out_shape=jax.ShapeDtypeStruct((M_pad, out_features), jnp.float32),
        grid_spec=pltpu.PrefetchScalarGridSpec(
            num_scalar_prefetch=0,
            grid=grid,                                       # (M tiles, N tiles, K steps)
            in_specs=[
                pl.BlockSpec((tm, tk), lambda i, j, k: (i, k)),          # x tile
                pl.BlockSpec((tk, Np_tile), lambda i, j, k: (k, j)),     # packed weights
                pl.BlockSpec((gpk, Np_tile), lambda i, j, k: (k, j)),    # packed zeros (per step)
                pl.BlockSpec((gpk, tn), lambda i, j, k: (k, j)),         # scales (per step)
                pl.BlockSpec((1, tn), lambda i, j, k: (0, j)),           # bias
            ],
            out_specs=pl.BlockSpec((tm, tn), lambda i, j, k: (i, j)),    # written on last k only
            scratch_shapes=[pltpu.VMEM((tm, tn), jnp.float32)],          # resident f32 accumulator
        ),
        compiler_params=pltpu.CompilerParams(
            dimension_semantics=("parallel", "parallel", "arbitrary"),
            vmem_limit_bytes=vmem_limit,
        ),
    )(x2d, qw_k, qz_k, sc_f32, b_f32)

    if M_pad != M:
        out2d = out2d[:M]
    return out2d.reshape(out_shape)


# ----------------------------------------- main -----------------------------------------
if __name__ == "__main__":
    in_features, out_features, group_size = 256, 256, 128
    batch, seq = 2, 8

    key = jax.random.PRNGKey(0)
    kx, kqw, kqz, ks, kb = jax.random.split(key, 5)

    x = jax.random.normal(kx, (batch, seq, in_features), dtype=jnp.float32).astype(jnp.float16)
    qweight = np.asarray(
        jax.random.bits(kqw, (in_features, out_features // PACK), dtype=jnp.uint32)
    ).view(np.int32)
    qzeros = np.asarray(
        jax.random.bits(kqz, (in_features // group_size, out_features // PACK), dtype=jnp.uint32)
    ).view(np.int32)
    scales = jax.random.uniform(
        ks, (in_features // group_size, out_features), minval=0.005, maxval=0.02
    ).astype(jnp.float16)
    bias = (0.1 * jax.random.normal(kb, (out_features,))).astype(jnp.float16)

    out = wqlinear_gemm_forward(
        x, jnp.asarray(qweight), jnp.asarray(qzeros), scales, bias, group_size
    )
    out = jax.block_until_ready(out)

    # plain-numpy reference of dequantize_gemm + matmul + bias (f32 end-to-end)
    W_int = awq_unpack_int4(qweight).astype(np.float32)
    Z_int = awq_unpack_int4(qzeros).astype(np.float32)
    sc = np.asarray(scales, np.float32)
    W_deq = (W_int - np.repeat(Z_int, group_size, axis=0)) * np.repeat(sc, group_size, axis=0)
    x2d_ref = np.asarray(x, np.float32).reshape(-1, in_features)
    ref = (x2d_ref @ W_deq + np.asarray(bias, np.float32)[None, :]).reshape(
        batch, seq, out_features
    )

    assert out.shape == (batch, seq, out_features) and out.dtype == jnp.float32
    np.testing.assert_allclose(np.asarray(out), ref, rtol=2e-2, atol=2e-2)
    print("KERNEL_OK")
</pallas_src>

<mosaic_0001>
module attributes {stable_mosaic.version = 11 : i64} {
  func.func @awq_gemm_kernel(%arg0: i32, %arg1: i32, %arg2: i32, %arg3: memref<16x256xbf16, #tpu.memory_space<vmem>>, %arg4: memref<256x32xi32, #tpu.memory_space<vmem>>, %arg5: memref<2x32xi32, #tpu.memory_space<vmem>>, %arg6: memref<2x256xf32, #tpu.memory_space<vmem>>, %arg7: memref<1x256xf32, #tpu.memory_space<vmem>>, %arg8: memref<16x256xf32, #tpu.memory_space<vmem>>, %arg9: memref<16x256xf32, #tpu.memory_space<vmem>>) attributes {dimension_semantics = [#tpu.dimension_semantics<parallel>, #tpu.dimension_semantics<parallel>, #tpu.dimension_semantics<arbitrary>], iteration_bounds = array<i64: 1, 1, 1>, scalar_prefetch = 0 : i64, scratch_operands = 1 : i64, tpu.core_type = #tpu.core_type<tc>, window_params = [{transform_indices = @transform_0, window_bounds = array<i64: 16, 256>}, {transform_indices = @transform_1, window_bounds = array<i64: 256, 32>}, {transform_indices = @transform_2, window_bounds = array<i64: 2, 32>}, {transform_indices = @transform_3, window_bounds = array<i64: 2, 256>}, {transform_indices = @transform_4, window_bounds = array<i64: 1, 256>}, {transform_indices = @transform_5, window_bounds = array<i64: 16, 256>}]} {
    %c0_i32 = arith.constant 0 : i32
    %0 = arith.cmpi eq, %arg2, %c0_i32 : i32
    %1 = arith.extui %0 : i1 to i32
    %c0_i32_0 = arith.constant 0 : i32
    %2 = arith.cmpi ne, %1, %c0_i32_0 : i32
    scf.if %2 {
      %cst_83 = arith.constant 0.000000e+00 : f32
      %176 = vector.broadcast %cst_83 : f32 to vector<16x256xf32>
      %c0_84 = arith.constant 0 : index
      %c0_85 = arith.constant 0 : index
      %177 = vector.load %arg9[%c0_84, %c0_85] : memref<16x256xf32, #tpu.memory_space<vmem>>, vector<16x256xf32>
      tpu.vector_store %arg9[%c0_84, %c0_85], %176 {strides = array<i32>} : memref<16x256xf32, #tpu.memory_space<vmem>>, vector<16x256xf32>,
    } else {
    }
    %c0 = arith.constant 0 : index
    %c0_1 = arith.constant 0 : index
    %3 = vector.load %arg3[%c0, %c0_1] : memref<16x256xbf16, #tpu.memory_space<vmem>>, vector<16x128xbf16>
    %c0_2 = arith.constant 0 : index
    %c0_3 = arith.constant 0 : index
    %4 = vector.load %arg4[%c0_2, %c0_3] : memref<256x32xi32, #tpu.memory_space<vmem>>, vector<128x32xi32>
    %c0_i32_4 = arith.constant 0 : i32
    %5 = vector.broadcast %c0_i32_4 : i32 to vector<128x32xi32>
    %6 = arith.shrsi %4, %5 : vector<128x32xi32>
    %c15_i32 = arith.constant 15 : i32
    %7 = vector.broadcast %c15_i32 : i32 to vector<128x32xi32>
    %8 = arith.andi %6, %7 : vector<128x32xi32>
    %c4_i32 = arith.constant 4 : i32
    %9 = vector.broadcast %c4_i32 : i32 to vector<128x32xi32>
    %10 = arith.shrsi %4, %9 : vector<128x32xi32>
    %c15_i32_5 = arith.constant 15 : i32
    %11 = vector.broadcast %c15_i32_5 : i32 to vector<128x32xi32>
    %12 = arith.andi %10, %11 : vector<128x32xi32>
    %c8_i32 = arith.constant 8 : i32
    %13 = vector.broadcast %c8_i32 : i32 to vector<128x32xi32>
    %14 = arith.shrsi %4, %13 : vector<128x32xi32>
    %c15_i32_6 = arith.constant 15 : i32
    %15 = vector.broadcast %c15_i32_6 : i32 to vector<128x32xi32>
    %16 = arith.andi %14, %15 : vector<128x32xi32>
    %c12_i32 = arith.constant 12 : i32
    %17 = vector.broadcast %c12_i32 : i32 to vector<128x32xi32>
    %18 = arith.shrsi %4, %17 : vector<128x32xi32>
    %c15_i32_7 = arith.constant 15 : i32
    %19 = vector.broadcast %c15_i32_7 : i32 to vector<128x32xi32>
    %20 = arith.andi %18, %19 : vector<128x32xi32>
    %c16_i32 = arith.constant 16 : i32
    %21 = vector.broadcast %c16_i32 : i32 to vector<128x32xi32>
    %22 = arith.shrsi %4, %21 : vector<128x32xi32>
    %c15_i32_8 = arith.constant 15 : i32
    %23 = vector.broadcast %c15_i32_8 : i32 to vector<128x32xi32>
    %24 = arith.andi %22, %23 : vector<128x32xi32>
    %c20_i32 = arith.constant 20 : i32
    %25 = vector.broadcast %c20_i32 : i32 to vector<128x32xi32>
    %26 = arith.shrsi %4, %25 : vector<128x32xi32>
    %c15_i32_9 = arith.constant 15 : i32
    %27 = vector.broadcast %c15_i32_9 : i32 to vector<128x32xi32>
    %28 = arith.andi %26, %27 : vector<128x32xi32>
    %c24_i32 = arith.constant 24 : i32
    %29 = vector.broadcast %c24_i32 : i32 to vector<128x32xi32>
    %30 = arith.shrsi %4, %29 : vector<128x32xi32>
    %c15_i32_10 = arith.constant 15 : i32
    %31 = vector.broadcast %c15_i32_10 : i32 to vector<128x32xi32>
    %32 = arith.andi %30, %31 : vector<128x32xi32>
    %c28_i32 = arith.constant 28 : i32
    %33 = vector.broadcast %c28_i32 : i32 to vector<128x32xi32>
    %34 = arith.shrsi %4, %33 : vector<128x32xi32>
    %c15_i32_11 = arith.constant 15 : i32
    %35 = vector.broadcast %c15_i32_11 : i32 to vector<128x32xi32>
    %36 = arith.andi %34, %35 : vector<128x32xi32>
    %37 = tpu.concatenate %8, %12, %16, %20, %24, %28, %32, %36 in 1 : vector<128x32xi32>, vector<128x32xi32>, vector<128x32xi32>, vector<128x32xi32>, vector<128x32xi32>, vector<128x32xi32>, vector<128x32xi32>, vector<128x32xi32> -> vector<128x256xi32>
    %38 = arith.sitofp %37 : vector<128x256xi32> to vector<128x256xbf16>
    %cst = arith.constant dense<0.000000e+00> : vector<16x256xf32>
    %39 = tpu.matmul %3, %38, %cst {dimension_numbers = #tpu.dot_dimension_numbers<[1], [0], [0], [1], [0, 0, 1, 1], [], []>} : vector<16x128xbf16>, vector<128x256xbf16>, vector<16x256xf32> -> vector<16x256xf32>
    %40 = arith.extf %3 : vector<16x128xbf16> to vector<16x128xf32>
    %cst_12 = arith.constant dense<0.000000e+00> : vector<16xf32>
    %41 = vector.multi_reduction <add>, %40, %cst_12 [1] : vector<16x128xf32> to vector<16xf32>
    %42 = vector.shape_cast %41 : vector<16xf32> to vector<16x1xf32>
    %c0_13 = arith.constant 0 : index
    %c0_14 = arith.constant 0 : index
    %43 = vector.load %arg5[%c0_13, %c0_14] : memref<2x32xi32, #tpu.memory_space<vmem>>, vector<1x32xi32>
    %c0_i32_15 = arith.constant 0 : i32
    %44 = vector.broadcast %c0_i32_15 : i32 to vector<1x32xi32>
    %45 = arith.shrsi %43, %44 : vector<1x32xi32>
    %c15_i32_16 = arith.constant 15 : i32
    %46 = vector.broadcast %c15_i32_16 : i32 to vector<1x32xi32>
    %47 = arith.andi %45, %46 : vector<1x32xi32>
    %c4_i32_17 = arith.constant 4 : i32
    %48 = vector.broadcast %c4_i32_17 : i32 to vector<1x32xi32>
    %49 = arith.shrsi %43, %48 : vector<1x32xi32>
    %c15_i32_18 = arith.constant 15 : i32
    %50 = vector.broadcast %c15_i32_18 : i32 to vector<1x32xi32>
    %51 = arith.andi %49, %50 : vector<1x32xi32>
    %c8_i32_19 = arith.constant 8 : i32
    %52 = vector.broadcast %c8_i32_19 : i32 to vector<1x32xi32>
    %53 = arith.shrsi %43, %52 : vector<1x32xi32>
    %c15_i32_20 = arith.constant 15 : i32
    %54 = vector.broadcast %c15_i32_20 : i32 to vector<1x32xi32>
    %55 = arith.andi %53, %54 : vector<1x32xi32>
    %c12_i32_21 = arith.constant 12 : i32
    %56 = vector.broadcast %c12_i32_21 : i32 to vector<1x32xi32>
    %57 = arith.shrsi %43, %56 : vector<1x32xi32>
    %c15_i32_22 = arith.constant 15 : i32
    %58 = vector.broadcast %c15_i32_22 : i32 to vector<1x32xi32>
    %59 = arith.andi %57, %58 : vector<1x32xi32>
    %c16_i32_23 = arith.constant 16 : i32
    %60 = vector.broadcast %c16_i32_23 : i32 to vector<1x32xi32>
    %61 = arith.shrsi %43, %60 : vector<1x32xi32>
    %c15_i32_24 = arith.constant 15 : i32
    %62 = vector.broadcast %c15_i32_24 : i32 to vector<1x32xi32>
    %63 = arith.andi %61, %62 : vector<1x32xi32>
    %c20_i32_25 = arith.constant 20 : i32
    %64 = vector.broadcast %c20_i32_25 : i32 to vector<1x32xi32>
    %65 = arith.shrsi %43, %64 : vector<1x32xi32>
    %c15_i32_26 = arith.constant 15 : i32
    %66 = vector.broadcast %c15_i32_26 : i32 to vector<1x32xi32>
    %67 = arith.andi %65, %66 : vector<1x32xi32>
    %c24_i32_27 = arith.constant 24 : i32
    %68 = vector.broadcast %c24_i32_27 : i32 to vector<1x32xi32>
    %69 = arith.shrsi %43, %68 : vector<1x32xi32>
    %c15_i32_28 = arith.constant 15 : i32
    %70 = vector.broadcast %c15_i32_28 : i32 to vector<1x32xi32>
    %71 = arith.andi %69, %70 : vector<1x32xi32>
    %c28_i32_29 = arith.constant 28 : i32
    %72 = vector.broadcast %c28_i32_29 : i32 to vector<1x32xi32>
    %73 = arith.shrsi %43, %72 : vector<1x32xi32>
    %c15_i32_30 = arith.constant 15 : i32
    %74 = vector.broadcast %c15_i32_30 : i32 to vector<1x32xi32>
    %75 = arith.andi %73, %74 : vector<1x32xi32>
    %76 = tpu.concatenate %47, %51, %55, %59, %63, %67, %71, %75 in 1 : vector<1x32xi32>, vector<1x32xi32>, vector<1x32xi32>, vector<1x32xi32>, vector<1x32xi32>, vector<1x32xi32>, vector<1x32xi32>, vector<1x32xi32> -> vector<1x256xi32>
    %77 = arith.sitofp %76 : vector<1x256xi32> to vector<1x256xf32>
    %c0_31 = arith.constant 0 : index
    %c0_32 = arith.constant 0 : index
    %78 = vector.load %arg6[%c0_31, %c0_32] : memref<2x256xf32, #tpu.memory_space<vmem>>, vector<1x256xf32>
    %c0_33 = arith.constant 0 : index
    %c0_34 = arith.constant 0 : index
    %79 = vector.load %arg9[%c0_33, %c0_34] : memref<16x256xf32, #tpu.memory_space<vmem>>, vector<16x256xf32>
    %80 = vector.broadcast %77 : vector<1x256xf32> to vector<16x256xf32>
    %81 = vector.broadcast %42 : vector<16x1xf32> to vector<16x256xf32>
    %82 = arith.mulf %80, %81 : vector<16x256xf32>
    %83 = arith.subf %39, %82 : vector<16x256xf32>
    %84 = vector.broadcast %78 : vector<1x256xf32> to vector<16x256xf32>
    %85 = arith.mulf %84, %83 : vector<16x256xf32>
    %86 = arith.addf %79, %85 : vector<16x256xf32>
    %c0_35 = arith.constant 0 : index
    %c0_36 = arith.constant 0 : index
    %87 = vector.load %arg9[%c0_35, %c0_36] : memref<16x256xf32, #tpu.memory_space<vmem>>, vector<16x256xf32>
    tpu.vector_store %arg9[%c0_35, %c0_36], %86 {strides = array<i32>} : memref<16x256xf32, #tpu.memory_space<vmem>>, vector<16x256xf32>,
    %c0_37 = arith.constant 0 : index
    %c128 = arith.constant 128 : index
    %88 = vector.load %arg3[%c0_37, %c128] : memref<16x256xbf16, #tpu.memory_space<vmem>>, vector<16x128xbf16>
    %c128_38 = arith.constant 128 : index
    %c0_39 = arith.constant 0 : index
    %89 = vector.load %arg4[%c128_38, %c0_39] : memref<256x32xi32, #tpu.memory_space<vmem>>, vector<128x32xi32>
    %c0_i32_40 = arith.constant 0 : i32
    %90 = vector.broadcast %c0_i32_40 : i32 to vector<128x32xi32>
    %91 = arith.shrsi %89, %90 : vector<128x32xi32>
    %c15_i32_41 = arith.constant 15 : i32
    %92 = vector.broadcast %c15_i32_41 : i32 to vector<128x32xi32>
    %93 = arith.andi %91, %92 : vector<128x32xi32>
    %c4_i32_42 = arith.constant 4 : i32
    %94 = vector.broadcast %c4_i32_42 : i32 to vector<128x32xi32>
    %95 = arith.shrsi %89, %94 : vector<128x32xi32>
    %c15_i32_43 = arith.constant 15 : i32
    %96 = vector.broadcast %c15_i32_43 : i32 to vector<128x32xi32>
    %97 = arith.andi %95, %96 : vector<128x32xi32>
    %c8_i32_44 = arith.constant 8 : i32
    %98 = vector.broadcast %c8_i32_44 : i32 to vector<128x32xi32>
    %99 = arith.shrsi %89, %98 : vector<128x32xi32>
    %c15_i32_45 = arith.constant 15 : i32
    %100 = vector.broadcast %c15_i32_45 : i32 to vector<128x32xi32>
    %101 = arith.andi %99, %100 : vector<128x32xi32>
    %c12_i32_46 = arith.constant 12 : i32
    %102 = vector.broadcast %c12_i32_46 : i32 to vector<128x32xi32>
    %103 = arith.shrsi %89, %102 : vector<128x32xi32>
    %c15_i32_47 = arith.constant 15 : i32
    %104 = vector.broadcast %c15_i32_47 : i32 to vector<128x32xi32>
    %105 = arith.andi %103, %104 : vector<128x32xi32>
    %c16_i32_48 = arith.constant 16 : i32
    %106 = vector.broadcast %c16_i32_48 : i32 to vector<128x32xi32>
    %107 = arith.shrsi %89, %106 : vector<128x32xi32>
    %c15_i32_49 = arith.constant 15 : i32
    %108 = vector.broadcast %c15_i32_49 : i32 to vector<128x32xi32>
    %109 = arith.andi %107, %108 : vector<128x32xi32>
    %c20_i32_50 = arith.constant 20 : i32
    %110 = vector.broadcast %c20_i32_50 : i32 to vector<128x32xi32>
    %111 = arith.shrsi %89, %110 : vector<128x32xi32>
    %c15_i32_51 = arith.constant 15 : i32
    %112 = vector.broadcast %c15_i32_51 : i32 to vector<128x32xi32>
    %113 = arith.andi %111, %112 : vector<128x32xi32>
    %c24_i32_52 = arith.constant 24 : i32
    %114 = vector.broadcast %c24_i32_52 : i32 to vector<128x32xi32>
    %115 = arith.shrsi %89, %114 : vector<128x32xi32>
    %c15_i32_53 = arith.constant 15 : i32
    %116 = vector.broadcast %c15_i32_53 : i32 to vector<128x32xi32>
    %117 = arith.andi %115, %116 : vector<128x32xi32>
    %c28_i32_54 = arith.constant 28 : i32
    %118 = vector.broadcast %c28_i32_54 : i32 to vector<128x32xi32>
    %119 = arith.shrsi %89, %118 : vector<128x32xi32>
    %c15_i32_55 = arith.constant 15 : i32
    %120 = vector.broadcast %c15_i32_55 : i32 to vector<128x32xi32>
    %121 = arith.andi %119, %120 : vector<128x32xi32>
    %122 = tpu.concatenate %93, %97, %101, %105, %109, %113, %117, %121 in 1 : vector<128x32xi32>, vector<128x32xi32>, vector<128x32xi32>, vector<128x32xi32>, vector<128x32xi32>, vector<128x32xi32>, vector<128x32xi32>, vector<128x32xi32> -> vector<128x256xi32>
    %123 = arith.sitofp %122 : vector<128x256xi32> to vector<128x256xbf16>
    %cst_56 = arith.constant dense<0.000000e+00> : vector<16x256xf32>
    %124 = tpu.matmul %88, %123, %cst_56 {dimension_numbers = #tpu.dot_dimension_numbers<[1], [0], [0], [1], [0, 0, 1, 1], [], []>} : vector<16x128xbf16>, vector<128x256xbf16>, vector<16x256xf32> -> vector<16x256xf32>
    %125 = arith.extf %88 : vector<16x128xbf16> to vector<16x128xf32>
    %cst_57 = arith.constant dense<0.000000e+00> : vector<16xf32>
    %126 = vector.multi_reduction <add>, %125, %cst_57 [1] : vector<16x128xf32> to vector<16xf32>
    %127 = vector.shape_cast %126 : vector<16xf32> to vector<16x1xf32>
    %c1 = arith.constant 1 : index
    %c0_58 = arith.constant 0 : index
    %128 = vector.load %arg5[%c1, %c0_58] : memref<2x32xi32, #tpu.memory_space<vmem>>, vector<1x32xi32>
    %c0_i32_59 = arith.constant 0 : i32
    %129 = vector.broadcast %c0_i32_59 : i32 to vector<1x32xi32>
    %130 = arith.shrsi %128, %129 : vector<1x32xi32>
    %c15_i32_60 = arith.constant 15 : i32
    %131 = vector.broadcast %c15_i32_60 : i32 to vector<1x32xi32>
    %132 = arith.andi %130, %131 : vector<1x32xi32>
    %c4_i32_61 = arith.constant 4 : i32
    %133 = vector.broadcast %c4_i32_61 : i32 to vector<1x32xi32>
    %134 = arith.shrsi %128, %133 : vector<1x32xi32>
    %c15_i32_62 = arith.constant 15 : i32
    %135 = vector.broadcast %c15_i32_62 : i32 to vector<1x32xi32>
    %136 = arith.andi %134, %135 : vector<1x32xi32>
    %c8_i32_63 = arith.constant 8 : i32
    %137 = vector.broadcast %c8_i32_63 : i32 to vector<1x32xi32>
    %138 = arith.shrsi %128, %137 : vector<1x32xi32>
    %c15_i32_64 = arith.constant 15 : i32
    %139 = vector.broadcast %c15_i32_64 : i32 to vector<1x32xi32>
    %140 = arith.andi %138, %139 : vector<1x32xi32>
    %c12_i32_65 = arith.constant 12 : i32
    %141 = vector.broadcast %c12_i32_65 : i32 to vector<1x32xi32>
    %142 = arith.shrsi %128, %141 : vector<1x32xi32>
    %c15_i32_66 = arith.constant 15 : i32
    %143 = vector.broadcast %c15_i32_66 : i32 to vector<1x32xi32>
    %144 = arith.andi %142, %143 : vector<1x32xi32>
    %c16_i32_67 = arith.constant 16 : i32
    %145 = vector.broadcast %c16_i32_67 : i32 to vector<1x32xi32>
    %146 = arith.shrsi %128, %145 : vector<1x32xi32>
    %c15_i32_68 = arith.constant 15 : i32
    %147 = vector.broadcast %c15_i32_68 : i32 to vector<1x32xi32>
    %148 = arith.andi %146, %147 : vector<1x32xi32>
    %c20_i32_69 = arith.constant 20 : i32
    %149 = vector.broadcast %c20_i32_69 : i32 to vector<1x32xi32>
    %150 = arith.shrsi %128, %149 : vector<1x32xi32>
    %c15_i32_70 = arith.constant 15 : i32
    %151 = vector.broadcast %c15_i32_70 : i32 to vector<1x32xi32>
    %152 = arith.andi %150, %151 : vector<1x32xi32>
    %c24_i32_71 = arith.constant 24 : i32
    %153 = vector.broadcast %c24_i32_71 : i32 to vector<1x32xi32>
    %154 = arith.shrsi %128, %153 : vector<1x32xi32>
    %c15_i32_72 = arith.constant 15 : i32
    %155 = vector.broadcast %c15_i32_72 : i32 to vector<1x32xi32>
    %156 = arith.andi %154, %155 : vector<1x32xi32>
    %c28_i32_73 = arith.constant 28 : i32
    %157 = vector.broadcast %c28_i32_73 : i32 to vector<1x32xi32>
    %158 = arith.shrsi %128, %157 : vector<1x32xi32>
    %c15_i32_74 = arith.constant 15 : i32
    %159 = vector.broadcast %c15_i32_74 : i32 to vector<1x32xi32>
    %160 = arith.andi %158, %159 : vector<1x32xi32>
    %161 = tpu.concatenate %132, %136, %140, %144, %148, %152, %156, %160 in 1 : vector<1x32xi32>, vector<1x32xi32>, vector<1x32xi32>, vector<1x32xi32>, vector<1x32xi32>, vector<1x32xi32>, vector<1x32xi32>, vector<1x32xi32> -> vector<1x256xi32>
    %162 = arith.sitofp %161 : vector<1x256xi32> to vector<1x256xf32>
    %c1_75 = arith.constant 1 : index
    %c0_76 = arith.constant 0 : index
    %163 = vector.load %arg6[%c1_75, %c0_76] : memref<2x256xf32, #tpu.memory_space<vmem>>, vector<1x256xf32>
    %c0_77 = arith.constant 0 : index
    %c0_78 = arith.constant 0 : index
    %164 = vector.load %arg9[%c0_77, %c0_78] : memref<16x256xf32, #tpu.memory_space<vmem>>, vector<16x256xf32>
    %165 = vector.broadcast %162 : vector<1x256xf32> to vector<16x256xf32>
    %166 = vector.broadcast %127 : vector<16x1xf32> to vector<16x256xf32>
    %167 = arith.mulf %165, %166 : vector<16x256xf32>
    %168 = arith.subf %124, %167 : vector<16x256xf32>
    %169 = vector.broadcast %163 : vector<1x256xf32> to vector<16x256xf32>
    %170 = arith.mulf %169, %168 : vector<16x256xf32>
    %171 = arith.addf %164, %170 : vector<16x256xf32>
    %c0_79 = arith.constant 0 : index
    %c0_80 = arith.constant 0 : index
    %172 = vector.load %arg9[%c0_79, %c0_80] : memref<16x256xf32, #tpu.memory_space<vmem>>, vector<16x256xf32>
    tpu.vector_store %arg9[%c0_79, %c0_80], %171 {strides = array<i32>} : memref<16x256xf32, #tpu.memory_space<vmem>>, vector<16x256xf32>,
    %c0_i32_81 = arith.constant 0 : i32
    %173 = arith.cmpi eq, %arg2, %c0_i32_81 : i32
    %174 = arith.extui %173 : i1 to i32
    %c0_i32_82 = arith.constant 0 : i32
    %175 = arith.cmpi ne, %174, %c0_i32_82 : i32
    scf.if %175 {
      %c0_83 = arith.constant 0 : index
      %c0_84 = arith.constant 0 : index
      %176 = vector.load %arg9[%c0_83, %c0_84] : memref<16x256xf32, #tpu.memory_space<vmem>>, vector<16x256xf32>
      %c0_85 = arith.constant 0 : index
      %c0_86 = arith.constant 0 : index
      %177 = vector.load %arg7[%c0_85, %c0_86] : memref<1x256xf32, #tpu.memory_space<vmem>>, vector<1x256xf32>
      %178 = vector.broadcast %177 : vector<1x256xf32> to vector<16x256xf32>
      %179 = arith.addf %176, %178 : vector<16x256xf32>
      %c0_87 = arith.constant 0 : index
      %c0_88 = arith.constant 0 : index
      %180 = vector.load %arg8[%c0_87, %c0_88] : memref<16x256xf32, #tpu.memory_space<vmem>>, vector<16x256xf32>
      tpu.vector_store %arg8[%c0_87, %c0_88], %179 {strides = array<i32>} : memref<16x256xf32, #tpu.memory_space<vmem>>, vector<16x256xf32>,
    } else {
    }
    return
  }
  func.func @transform_0(%arg0: i32, %arg1: i32, %arg2: i32) -> (i32, i32) {
    %c0_i32 = arith.constant 0 : i32
    return %arg0, %arg2 : i32, i32
  }
  func.func @transform_1(%arg0: i32, %arg1: i32, %arg2: i32) -> (i32, i32) {
    %c0_i32 = arith.constant 0 : i32
    return %arg2, %arg1 : i32, i32
  }
  func.func @transform_2(%arg0: i32, %arg1: i32, %arg2: i32) -> (i32, i32) {
    %c0_i32 = arith.constant 0 : i32
    return %arg2, %arg1 : i32, i32
  }
  func.func @transform_3(%arg0: i32, %arg1: i32, %arg2: i32) -> (i32, i32) {
    %c0_i32 = arith.constant 0 : i32
    return %arg2, %arg1 : i32, i32
  }
  func.func @transform_4(%arg0: i32, %arg1: i32, %arg2: i32) -> (i32, i32) {
    %c0_i32 = arith.constant 0 : i32
    %c0_i32_0 = arith.constant 0 : i32
    return %c0_i32, %arg1 : i32, i32
  }
  func.func @transform_5(%arg0: i32, %arg1: i32, %arg2: i32) -> (i32, i32) {
    %c0_i32 = arith.constant 0 : i32
    return %arg0, %arg1 : i32, i32
  }
}

</mosaic_0001>

<llo_original>
// kernel: tpu_custom_call.1
$region0: #{tpu_custom_call.1}
  #allocation0 [shape = 'u32[]', space=smem, size = 0x4, offset = 0x4, fixed_abs, tag = 'smem constant byte address 0x4 - core index']
  #allocation1 [shape = 'u32[144,128]{1,0:T(1,128)}', space=vmem, size = 0x12000, scoped, tag = 'internal scratch']
  #allocation2 [shape = 'f32[16,256]{1,0:T(8,128)}', space=vmem, size = 0x4000, scoped, tag = 'scratch operand']
  %s0 = inlined_call_operand.vmem [shape: bf16[16,256], index: 0, kind: input, shape index: {}]
  %s1 = inlined_call_operand.vmem [shape: s32[256,32], index: 1, kind: input, shape index: {}]
  %s2 = inlined_call_operand.vmem [shape: s32[2,32], index: 2, kind: input, shape index: {}]
  %s3 = inlined_call_operand.vmem [shape: f32[2,256], index: 3, kind: input, shape index: {}]
  %s4 = inlined_call_operand.vmem [shape: f32[1,256], index: 4, kind: input, shape index: {}]
  %s5 = inlined_call_operand.hbm [shape: f32[16,256], index: 5, kind: output, shape index: {}]
  %s6 = sld [smem:[#allocation0]]
  $region38: #{tpu_custom_call.1} parent=0
    _
  %s8 = ssub.s32 1, %s6
  %s9 = scalar_select 0, %s8, %s6
  $region1: #{tpu_custom_call.1} parent=0
    #allocation3 [shape = 'u8[16384]{0}', space=vmem, size = 0x4000, scoped, tag = 'output window, operand 0, single buffered']
    #allocation4 [shape = 's32[1]{0}', space=sflag, size = 0x4, scoped, tag = 'scoped memory for tpu_custom_call.1']
    %10 = vsyncpa [#allocation4], 0
    // Predicated region
    $region2: #{tpu_custom_call.1} parent=1 // pred_check
      _
    $region3: #{tpu_custom_call.1} parent=1 // pred_check_branch
      %12 = sbr.rel (0) target = $region5
    $region4: #{tpu_custom_call.1} parent=1 // pred_region
      _
    $region5: #{tpu_custom_call.1} parent=1 // pred_fallthru
      _
    // Predicated region
    $region6: #{tpu_custom_call.1} parent=1 // pred_check
      _
    $region7: #{tpu_custom_call.1} parent=1 // pred_check_branch
      %14 = sbr.rel (0) target = $region9
    $region8: #{tpu_custom_call.1} parent=1 // pred_region
      _
    $region9: #{tpu_custom_call.1} parent=1 // pred_fallthru
      _
    // Predicated region
    $region10: #{tpu_custom_call.1} parent=1 // pred_check
      _
    $region11: #{tpu_custom_call.1} parent=1 // pred_check_branch
      %16 = sbr.rel (0) target = $region13
    $region12: #{tpu_custom_call.1} parent=1 // pred_region
      _
    $region13: #{tpu_custom_call.1} parent=1 // pred_fallthru
      _
    // Predicated region
    $region14: #{tpu_custom_call.1} parent=1 // pred_check
      _
    $region15: #{tpu_custom_call.1} parent=1 // pred_check_branch
      %18 = sbr.rel (0) target = $region17
    $region16: #{tpu_custom_call.1} parent=1 // pred_region
      _
    $region17: #{tpu_custom_call.1} parent=1 // pred_fallthru
      _
    // Predicated region
    $region18: #{tpu_custom_call.1} parent=1 // pred_check
      _
    $region19: #{tpu_custom_call.1} parent=1 // pred_check_branch
      %20 = sbr.rel (0) target = $region21
    $region20: #{tpu_custom_call.1} parent=1 // pred_region
      _
    $region21: #{tpu_custom_call.1} parent=1 // pred_fallthru
      _
    %p22 = scmp.eq.s32.totalorder 0, 0
    // Predicated region
    $region22: #{tpu_custom_call.1} parent=1 // pred_check
      %p23 = pneg %p22
    $region23: #{tpu_custom_call.1} parent=1 // pred_check_branch
      %25 = sbr.rel (%p23) target = $region25
    $region24: #{tpu_custom_call.1} parent=1 // pred_region
      %26 = vst [vmem:[#allocation2] sm:$0xff] 0.0
      %27 = vst [vmem:[#allocation2 + $0x8] sm:$0xff] 0.0
      %28 = vst [vmem:[#allocation2 + $0x10] sm:$0xff] 0.0
      %29 = vst [vmem:[#allocation2 + $0x18] sm:$0xff] 0.0
    $region25: #{tpu_custom_call.1} parent=1 // pred_fallthru
      _
    %v30 = vld [vmem:[%s0] sm:$0xf]
    %v31 = vld [vmem:[%s0 + $0x8] sm:$0xf]
    %v32 = vld [vmem:[%s1] sm:$0xff]
    %v33 = vld [vmem:[%s1 + $0x8] sm:$0xff]
    %v34 = vld [vmem:[%s1 + $0x10] sm:$0xff]
    %v35 = vld [vmem:[%s1 + $0x18] sm:$0xff]
    %v36 = vld [vmem:[%s1 + $0x20] sm:$0xff]
    %v37 = vld [vmem:[%s1 + $0x28] sm:$0xff]
    %v38 = vld [vmem:[%s1 + $0x30] sm:$0xff]
    %v39 = vld [vmem:[%s1 + $0x38] sm:$0xff]
    %v40 = vld [vmem:[%s1 + $0x40] sm:$0xff]
    %v41 = vld [vmem:[%s1 + $0x48] sm:$0xff]
    %v42 = vld [vmem:[%s1 + $0x50] sm:$0xff]
    %v43 = vld [vmem:[%s1 + $0x58] sm:$0xff]
    %v44 = vld [vmem:[%s1 + $0x60] sm:$0xff]
    %v45 = vld [vmem:[%s1 + $0x68] sm:$0xff]
    %v46 = vld [vmem:[%s1 + $0x70] sm:$0xff]
    %v47 = vld [vmem:[%s1 + $0x78] sm:$0xff]
    %v48 = vand.u32 %v32, 15
    %v49 = vand.u32 %v33, 15
    %v50 = vand.u32 %v34, 15
    %v51 = vand.u32 %v35, 15
    %v52 = vand.u32 %v36, 15
    %v53 = vand.u32 %v37, 15
    %v54 = vand.u32 %v38, 15
    %v55 = vand.u32 %v39, 15
    %v56 = vand.u32 %v40, 15
    %v57 = vand.u32 %v41, 15
    %v58 = vand.u32 %v42, 15
    %v59 = vand.u32 %v43, 15
    %v60 = vand.u32 %v44, 15
    %v61 = vand.u32 %v45, 15
    %v62 = vand.u32 %v46, 15
    %v63 = vand.u32 %v47, 15
    %v64 = vshra.s32 %v32, 4
    %v65 = vshra.s32 %v33, 4
    %v66 = vshra.s32 %v34, 4
    %v67 = vshra.s32 %v35, 4
    %v68 = vshra.s32 %v36, 4
    %v69 = vshra.s32 %v37, 4
    %v70 = vshra.s32 %v38, 4
    %v71 = vshra.s32 %v39, 4
    %v72 = vshra.s32 %v40, 4
    %v73 = vshra.s32 %v41, 4
    %v74 = vshra.s32 %v42, 4
    %v75 = vshra.s32 %v43, 4
    %v76 = vshra.s32 %v44, 4
    %v77 = vshra.s32 %v45, 4
    %v78 = vshra.s32 %v46, 4
    %v79 = vshra.s32 %v47, 4
    %v80 = vand.u32 %v64, 15
    %v81 = vand.u32 %v65, 15
    %v82 = vand.u32 %v66, 15
    %v83 = vand.u32 %v67, 15
    %v84 = vand.u32 %v68, 15
    %v85 = vand.u32 %v69, 15
    %v86 = vand.u32 %v70, 15
    %v87 = vand.u32 %v71, 15
    %v88 = vand.u32 %v72, 15
    %v89 = vand.u32 %v73, 15
    %v90 = vand.u32 %v74, 15
    %v91 = vand.u32 %v75, 15
    %v92 = vand.u32 %v76, 15
    %v93 = vand.u32 %v77, 15
    %v94 = vand.u32 %v78, 15
    %v95 = vand.u32 %v79, 15
    %v96 = vshra.s32 %v32, 8
    %v97 = vshra.s32 %v33, 8
    %v98 = vshra.s32 %v34, 8
    %v99 = vshra.s32 %v35, 8
    %v100 = vshra.s32 %v36, 8
    %v101 = vshra.s32 %v37, 8
    %v102 = vshra.s32 %v38, 8
    %v103 = vshra.s32 %v39, 8
    %v104 = vshra.s32 %v40, 8
    %v105 = vshra.s32 %v41, 8
    %v106 = vshra.s32 %v42, 8
    %v107 = vshra.s32 %v43, 8
    %v108 = vshra.s32 %v44, 8
    %v109 = vshra.s32 %v45, 8
    %v110 = vshra.s32 %v46, 8
    %v111 = vshra.s32 %v47, 8
    %v112 = vand.u32 %v96, 15
    %v113 = vand.u32 %v97, 15
    %v114 = vand.u32 %v98, 15
    %v115 = vand.u32 %v99, 15
    %v116 = vand.u32 %v100, 15
    %v117 = vand.u32 %v101, 15
    %v118 = vand.u32 %v102, 15
    %v119 = vand.u32 %v103, 15
    %v120 = vand.u32 %v104, 15
    %v121 = vand.u32 %v105, 15
    %v122 = vand.u32 %v106, 15
    %v123 = vand.u32 %v107, 15
    %v124 = vand.u32 %v108, 15
    %v125 = vand.u32 %v109, 15
    %v126 = vand.u32 %v110, 15
    %v127 = vand.u32 %v111, 15
    %v128 = vshra.s32 %v32, 12
    %v129 = vshra.s32 %v33, 12
    %v130 = vshra.s32 %v34, 12
    %v131 = vshra.s32 %v35, 12
    %v132 = vshra.s32 %v36, 12
    %v133 = vshra.s32 %v37, 12
    %v134 = vshra.s32 %v38, 12
    %v135 = vshra.s32 %v39, 12
    %v136 = vshra.s32 %v40, 12
    %v137 = vshra.s32 %v41, 12
    %v138 = vshra.s32 %v42, 12
    %v139 = vshra.s32 %v43, 12
    %v140 = vshra.s32 %v44, 12
    %v141 = vshra.s32 %v45, 12
    %v142 = vshra.s32 %v46, 12
    %v143 = vshra.s32 %v47, 12
    %v144 = vand.u32 %v128, 15
    %v145 = vand.u32 %v129, 15
    %v146 = vand.u32 %v130, 15
    %v147 = vand.u32 %v131, 15
    %v148 = vand.u32 %v132, 15
    %v149 = vand.u32 %v133, 15
    %v150 = vand.u32 %v134, 15
    %v151 = vand.u32 %v135, 15
    %v152 = vand.u32 %v136, 15
    %v153 = vand.u32 %v137, 15
    %v154 = vand.u32 %v138, 15
    %v155 = vand.u32 %v139, 15
    %v156 = vand.u32 %v140, 15
    %v157 = vand.u32 %v141, 15
    %v158 = vand.u32 %v142, 15
    %v159 = vand.u32 %v143, 15
    %v160 = vshra.s32 %v32, 16
    %v161 = vshra.s32 %v33, 16
    %v162 = vshra.s32 %v34, 16
    %v163 = vshra.s32 %v35, 16
    %v164 = vshra.s32 %v36, 16
    %v165 = vshra.s32 %v37, 16
    %v166 = vshra.s32 %v38, 16
    %v167 = vshra.s32 %v39, 16
    %v168 = vshra.s32 %v40, 16
    %v169 = vshra.s32 %v41, 16
    %v170 = vshra.s32 %v42, 16
    %v171 = vshra.s32 %v43, 16
    %v172 = vshra.s32 %v44, 16
    %v173 = vshra.s32 %v45, 16
    %v174 = vshra.s32 %v46, 16
    %v175 = vshra.s32 %v47, 16
    %v176 = vand.u32 %v160, 15
    %v177 = vand.u32 %v161, 15
    %v178 = vand.u32 %v162, 15
    %v179 = vand.u32 %v163, 15
    %v180 = vand.u32 %v164, 15
    %v181 = vand.u32 %v165, 15
    %v182 = vand.u32 %v166, 15
    %v183 = vand.u32 %v167, 15
    %v184 = vand.u32 %v168, 15
    %v185 = vand.u32 %v169, 15
    %v186 = vand.u32 %v170, 15
    %v187 = vand.u32 %v171, 15
    %v188 = vand.u32 %v172, 15
    %v189 = vand.u32 %v173, 15
    %v190 = vand.u32 %v174, 15
    %v191 = vand.u32 %v175, 15
    %v192 = vshra.s32 %v32, 20
    %v193 = vshra.s32 %v33, 20
    %v194 = vshra.s32 %v34, 20
    %v195 = vshra.s32 %v35, 20
    %v196 = vshra.s32 %v36, 20
    %v197 = vshra.s32 %v37, 20
    %v198 = vshra.s32 %v38, 20
    %v199 = vshra.s32 %v39, 20
    %v200 = vshra.s32 %v40, 20
    %v201 = vshra.s32 %v41, 20
    %v202 = vshra.s32 %v42, 20
    %v203 = vshra.s32 %v43, 20
    %v204 = vshra.s32 %v44, 20
    %v205 = vshra.s32 %v45, 20
    %v206 = vshra.s32 %v46, 20
    %v207 = vshra.s32 %v47, 20
    %v208 = vand.u32 %v192, 15
    %v209 = vand.u32 %v193, 15
    %v210 = vand.u32 %v194, 15
    %v211 = vand.u32 %v195, 15
    %v212 = vand.u32 %v196, 15
    %v213 = vand.u32 %v197, 15
    %v214 = vand.u32 %v198, 15
    %v215 = vand.u32 %v199, 15
    %v216 = vand.u32 %v200, 15
    %v217 = vand.u32 %v201, 15
    %v218 = vand.u32 %v202, 15
    %v219 = vand.u32 %v203, 15
    %v220 = vand.u32 %v204, 15
    %v221 = vand.u32 %v205, 15
    %v222 = vand.u32 %v206, 15
    %v223 = vand.u32 %v207, 15
    %v224 = vshra.s32 %v32, 24
    %v225 = vshra.s32 %v33, 24
    %v226 = vshra.s32 %v34, 24
    %v227 = vshra.s32 %v35, 24
    %v228 = vshra.s32 %v36, 24
    %v229 = vshra.s32 %v37, 24
    %v230 = vshra.s32 %v38, 24
    %v231 = vshra.s32 %v39, 24
    %v232 = vshra.s32 %v40, 24
    %v233 = vshra.s32 %v41, 24
    %v234 = vshra.s32 %v42, 24
    %v235 = vshra.s32 %v43, 24
    %v236 = vshra.s32 %v44, 24
    %v237 = vshra.s32 %v45, 24
    %v238 = vshra.s32 %v46, 24
    %v239 = vshra.s32 %v47, 24
    %v240 = vand.u32 %v224, 15
    %v241 = vand.u32 %v225, 15
    %v242 = vand.u32 %v226, 15
    %v243 = vand.u32 %v227, 15
    %v244 = vand.u32 %v228, 15
    %v245 = vand.u32 %v229, 15
    %v246 = vand.u32 %v230, 15
    %v247 = vand.u32 %v231, 15
    %v248 = vand.u32 %v232, 15
    %v249 = vand.u32 %v233, 15
    %v250 = vand.u32 %v234, 15
    %v251 = vand.u32 %v235, 15
    %v252 = vand.u32 %v236, 15
    %v253 = vand.u32 %v237, 15
    %v254 = vand.u32 %v238, 15
    %v255 = vand.u32 %v239, 15
    %v256 = vshra.s32 %v32, 28
    %v257 = vshra.s32 %v33, 28
    %v258 = vshra.s32 %v34, 28
    %v259 = vshra.s32 %v35, 28
    %v260 = vshra.s32 %v36, 28
    %v261 = vshra.s32 %v37, 28
    %v262 = vshra.s32 %v38, 28
    %v263 = vshra.s32 %v39, 28
    %v264 = vshra.s32 %v40, 28
    %v265 = vshra.s32 %v41, 28
    %v266 = vshra.s32 %v42, 28
    %v267 = vshra.s32 %v43, 28
    %v268 = vshra.s32 %v44, 28
    %v269 = vshra.s32 %v45, 28
    %v270 = vshra.s32 %v46, 28
    %v271 = vshra.s32 %v47, 28
    %v272 = vand.u32 %v256, 15
    %v273 = vand.u32 %v257, 15
    %v274 = vand.u32 %v258, 15
    %v275 = vand.u32 %v259, 15
    %v276 = vand.u32 %v260, 15
    %v277 = vand.u32 %v261, 15
    %v278 = vand.u32 %v262, 15
    %v279 = vand.u32 %v263, 15
    %v280 = vand.u32 %v264, 15
    %v281 = vand.u32 %v265, 15
    %v282 = vand.u32 %v266, 15
    %v283 = vand.u32 %v267, 15
    %v284 = vand.u32 %v268, 15
    %v285 = vand.u32 %v269, 15
    %v286 = vand.u32 %v270, 15
    %v287 = vand.u32 %v271, 15
    %288 = vrot.lane.b32.xlu0 %v80, 32
    %v289 = vpop.permute.xlu0 %288
    %290 = vrot.lane.b32.xlu0 %v81, 32
    %v291 = vpop.permute.xlu0 %290
    %292 = vrot.lane.b32.xlu0 %v82, 32
    %v293 = vpop.permute.xlu0 %292
    %294 = vrot.lane.b32.xlu0 %v83, 32
    %v295 = vpop.permute.xlu0 %294
    %296 = vrot.lane.b32.xlu0 %v84, 32
    %v297 = vpop.permute.xlu0 %296
    %298 = vrot.lane.b32.xlu0 %v85, 32
    %v299 = vpop.permute.xlu0 %298
    %300 = vrot.lane.b32.xlu0 %v86, 32
    %v301 = vpop.permute.xlu0 %300
    %302 = vrot.lane.b32.xlu0 %v87, 32
    %v303 = vpop.permute.xlu0 %302
    %304 = vrot.lane.b32.xlu0 %v88, 32
    %v305 = vpop.permute.xlu0 %304
    %306 = vrot.lane.b32.xlu0 %v89, 32
    %v307 = vpop.permute.xlu0 %306
    %308 = vrot.lane.b32.xlu0 %v90, 32
    %v309 = vpop.permute.xlu0 %308
    %310 = vrot.lane.b32.xlu0 %v91, 32
    %v311 = vpop.permute.xlu0 %310
    %312 = vrot.lane.b32.xlu0 %v92, 32
    %v313 = vpop.permute.xlu0 %312
    %314 = vrot.lane.b32.xlu0 %v93, 32
    %v315 = vpop.permute.xlu0 %314
    %316 = vrot.lane.b32.xlu0 %v94, 32
    %v317 = vpop.permute.xlu0 %316
    %318 = vrot.lane.b32.xlu0 %v95, 32
    %v319 = vpop.permute.xlu0 %318
    %320 = vrot.lane.b32.xlu0 %v112, 64
    %v321 = vpop.permute.xlu0 %320
    %322 = vrot.lane.b32.xlu0 %v113, 64
    %v323 = vpop.permute.xlu0 %322
    %324 = vrot.lane.b32.xlu0 %v114, 64
    %v325 = vpop.permute.xlu0 %324
    %326 = vrot.lane.b32.xlu0 %v115, 64
    %v327 = vpop.permute.xlu0 %326
    %328 = vrot.lane.b32.xlu0 %v116, 64
    %v329 = vpop.permute.xlu0 %328
    %330 = vrot.lane.b32.xlu0 %v117, 64
    %v331 = vpop.permute.xlu0 %330
    %332 = vrot.lane.b32.xlu0 %v118, 64
    %v333 = vpop.permute.xlu0 %332
    %334 = vrot.lane.b32.xlu0 %v119, 64
    %v335 = vpop.permute.xlu0 %334
    %336 = vrot.lane.b32.xlu0 %v120, 64
    %v337 = vpop.permute.xlu0 %336
    %338 = vrot.lane.b32.xlu0 %v121, 64
    %v339 = vpop.permute.xlu0 %338
    %340 = vrot.lane.b32.xlu0 %v122, 64
    %v341 = vpop.permute.xlu0 %340
    %342 = vrot.lane.b32.xlu0 %v123, 64
    %v343 = vpop.permute.xlu0 %342
    %344 = vrot.lane.b32.xlu0 %v124, 64
    %v345 = vpop.permute.xlu0 %344
    %346 = vrot.lane.b32.xlu0 %v125, 64
    %v347 = vpop.permute.xlu0 %346
    %348 = vrot.lane.b32.xlu0 %v126, 64
    %v349 = vpop.permute.xlu0 %348
    %350 = vrot.lane.b32.xlu0 %v127, 64
    %v351 = vpop.permute.xlu0 %350
    %352 = vrot.lane.b32.xlu0 %v144, 96
    %v353 = vpop.permute.xlu0 %352
    %354 = vrot.lane.b32.xlu0 %v145, 96
    %v355 = vpop.permute.xlu0 %354
    %356 = vrot.lane.b32.xlu0 %v146, 96
    %v357 = vpop.permute.xlu0 %356
    %358 = vrot.lane.b32.xlu0 %v147, 96
    %v359 = vpop.permute.xlu0 %358
    %360 = vrot.lane.b32.xlu0 %v148, 96
    %v361 = vpop.permute.xlu0 %360
    %362 = vrot.lane.b32.xlu0 %v149, 96
    %v363 = vpop.permute.xlu0 %362
    %364 = vrot.lane.b32.xlu0 %v150, 96
    %v365 = vpop.permute.xlu0 %364
    %366 = vrot.lane.b32.xlu0 %v151, 96
    %v367 = vpop.permute.xlu0 %366
    %368 = vrot.lane.b32.xlu0 %v152, 96
    %v369 = vpop.permute.xlu0 %368
    %370 = vrot.lane.b32.xlu0 %v153, 96
    %v371 = vpop.permute.xlu0 %370
    %372 = vrot.lane.b32.xlu0 %v154, 96
    %v373 = vpop.permute.xlu0 %372
    %374 = vrot.lane.b32.xlu0 %v155, 96
    %v375 = vpop.permute.xlu0 %374
    %376 = vrot.lane.b32.xlu0 %v156, 96
    %v377 = vpop.permute.xlu0 %376
    %378 = vrot.lane.b32.xlu0 %v157, 96
    %v379 = vpop.permute.xlu0 %378
    %380 = vrot.lane.b32.xlu0 %v158, 96
    %v381 = vpop.permute.xlu0 %380
    %382 = vrot.lane.b32.xlu0 %v159, 96
    %v383 = vpop.permute.xlu0 %382
    %384 = vrot.lane.b32.xlu0 %v208, 32
    %v385 = vpop.permute.xlu0 %384
    %386 = vrot.lane.b32.xlu0 %v209, 32
    %v387 = vpop.permute.xlu0 %386
    %388 = vrot.lane.b32.xlu0 %v210, 32
    %v389 = vpop.permute.xlu0 %388
    %390 = vrot.lane.b32.xlu0 %v211, 32
    %v391 = vpop.permute.xlu0 %390
    %392 = vrot.lane.b32.xlu0 %v212, 32
    %v393 = vpop.permute.xlu0 %392
    %394 = vrot.lane.b32.xlu0 %v213, 32
    %v395 = vpop.permute.xlu0 %394
    %396 = vrot.lane.b32.xlu0 %v214, 32
    %v397 = vpop.permute.xlu0 %396
    %398 = vrot.lane.b32.xlu0 %v215, 32
    %v399 = vpop.permute.xlu0 %398
    %400 = vrot.lane.b32.xlu0 %v216, 32
    %v401 = vpop.permute.xlu0 %400
    %402 = vrot.lane.b32.xlu0 %v217, 32
    %v403 = vpop.permute.xlu0 %402
    %404 = vrot.lane.b32.xlu0 %v218, 32
    %v405 = vpop.permute.xlu0 %404
    %406 = vrot.lane.b32.xlu0 %v219, 32
    %v407 = vpop.permute.xlu0 %406
    %408 = vrot.lane.b32.xlu0 %v220, 32
    %v409 = vpop.permute.xlu0 %408
    %410 = vrot.lane.b32.xlu0 %v221, 32
    %v411 = vpop.permute.xlu0 %410
    %412 = vrot.lane.b32.xlu0 %v222, 32
    %v413 = vpop.permute.xlu0 %412
    %414 = vrot.lane.b32.xlu0 %v223, 32
    %v415 = vpop.permute.xlu0 %414
    %416 = vrot.lane.b32.xlu0 %v240, 64
    %v417 = vpop.permute.xlu0 %416
    %418 = vrot.lane.b32.xlu0 %v241, 64
    %v419 = vpop.permute.xlu0 %418
    %420 = vrot.lane.b32.xlu0 %v242, 64
    %v421 = vpop.permute.xlu0 %420
    %422 = vrot.lane.b32.xlu0 %v243, 64
    %v423 = vpop.permute.xlu0 %422
    %424 = vrot.lane.b32.xlu0 %v244, 64
    %v425 = vpop.permute.xlu0 %424
    %426 = vrot.lane.b32.xlu0 %v245, 64
    %v427 = vpop.permute.xlu0 %426
    %428 = vrot.lane.b32.xlu0 %v246, 64
    %v429 = vpop.permute.xlu0 %428
    %430 = vrot.lane.b32.xlu0 %v247, 64
    %v431 = vpop.permute.xlu0 %430
    %432 = vrot.lane.b32.xlu0 %v248, 64
    %v433 = vpop.permute.xlu0 %432
    %434 = vrot.lane.b32.xlu0 %v249, 64
    %v435 = vpop.permute.xlu0 %434
    %436 = vrot.lane.b32.xlu0 %v250, 64
    %v437 = vpop.permute.xlu0 %436
    %438 = vrot.lane.b32.xlu0 %v251, 64
    %v439 = vpop.permute.xlu0 %438
    %440 = vrot.lane.b32.xlu0 %v252, 64
    %v441 = vpop.permute.xlu0 %440
    %442 = vrot.lane.b32.xlu0 %v253, 64
    %v443 = vpop.permute.xlu0 %442
    %444 = vrot.lane.b32.xlu0 %v254, 64
    %v445 = vpop.permute.xlu0 %444
    %446 = vrot.lane.b32.xlu0 %v255, 64
    %v447 = vpop.permute.xlu0 %446
    %448 = vrot.lane.b32.xlu0 %v272, 96
    %v449 = vpop.permute.xlu0 %448
    %450 = vrot.lane.b32.xlu0 %v273, 96
    %v451 = vpop.permute.xlu0 %450
    %452 = vrot.lane.b32.xlu0 %v274, 96
    %v453 = vpop.permute.xlu0 %452
    %454 = vrot.lane.b32.xlu0 %v275, 96
    %v455 = vpop.permute.xlu0 %454
    %456 = vrot.lane.b32.xlu0 %v276, 96
    %v457 = vpop.permute.xlu0 %456
    %458 = vrot.lane.b32.xlu0 %v277, 96
    %v459 = vpop.permute.xlu0 %458
    %460 = vrot.lane.b32.xlu0 %v278, 96
    %v461 = vpop.permute.xlu0 %460
    %462 = vrot.lane.b32.xlu0 %v279, 96
    %v463 = vpop.permute.xlu0 %462
    %464 = vrot.lane.b32.xlu0 %v280, 96
    %v465 = vpop.permute.xlu0 %464
    %466 = vrot.lane.b32.xlu0 %v281, 96
    %v467 = vpop.permute.xlu0 %466
    %468 = vrot.lane.b32.xlu0 %v282, 96
    %v469 = vpop.permute.xlu0 %468
    %470 = vrot.lane.b32.xlu0 %v283, 96
    %v471 = vpop.permute.xlu0 %470
    %472 = vrot.lane.b32.xlu0 %v284, 96
    %v473 = vpop.permute.xlu0 %472
    %474 = vrot.lane.b32.xlu0 %v285, 96
    %v475 = vpop.permute.xlu0 %474
    %476 = vrot.lane.b32.xlu0 %v286, 96
    %v477 = vpop.permute.xlu0 %476
    %478 = vrot.lane.b32.xlu0 %v287, 96
    %v479 = vpop.permute.xlu0 %478
    %vm480 = vcmask 261120
    %v481 = vsel %vm480, %v48, %v289
    %v482 = vsel %vm480, %v49, %v291
    %v483 = vsel %vm480, %v50, %v293
    %v484 = vsel %vm480, %v51, %v295
    %v485 = vsel %vm480, %v52, %v297
    %v486 = vsel %vm480, %v53, %v299
    %v487 = vsel %vm480, %v54, %v301
    %v488 = vsel %vm480, %v55, %v303
    %v489 = vsel %vm480, %v56, %v305
    %v490 = vsel %vm480, %v57, %v307
    %v491 = vsel %vm480, %v58, %v309
    %v492 = vsel %vm480, %v59, %v311
    %v493 = vsel %vm480, %v60, %v313
    %v494 = vsel %vm480, %v61, %v315
    %v495 = vsel %vm480, %v62, %v317
    %v496 = vsel %vm480, %v63, %v319
    %vm497 = vcmask 523264
    %v498 = vsel %vm497, %v481, %v321
    %v499 = vsel %vm497, %v482, %v323
    %v500 = vsel %vm497, %v483, %v325
    %v501 = vsel %vm497, %v484, %v327
    %v502 = vsel %vm497, %v485, %v329
    %v503 = vsel %vm497, %v486, %v331
    %v504 = vsel %vm497, %v487, %v333
    %v505 = vsel %vm497, %v488, %v335
    %v506 = vsel %vm497, %v489, %v337
    %v507 = vsel %vm497, %v490, %v339
    %v508 = vsel %vm497, %v491, %v341
    %v509 = vsel %vm497, %v492, %v343
    %v510 = vsel %vm497, %v493, %v345
    %v511 = vsel %vm497, %v494, %v347
    %v512 = vsel %vm497, %v495, %v349
    %v513 = vsel %vm497, %v496, %v351
    %vm514 = vcmask 785408
    %v515 = vsel %vm514, %v498, %v353
    %v516 = vsel %vm514, %v499, %v355
    %v517 = vsel %vm514, %v500, %v357
    %v518 = vsel %vm514, %v501, %v359
    %v519 = vsel %vm514, %v502, %v361
    %v520 = vsel %vm514, %v503, %v363
    %v521 = vsel %vm514, %v504, %v365
    %v522 = vsel %vm514, %v505, %v367
    %v523 = vsel %vm514, %v506, %v369
    %v524 = vsel %vm514, %v507, %v371
    %v525 = vsel %vm514, %v508, %v373
    %v526 = vsel %vm514, %v509, %v375
    %v527 = vsel %vm514, %v510, %v377
    %v528 = vsel %vm514, %v511, %v379
    %v529 = vsel %vm514, %v512, %v381
    %v530 = vsel %vm514, %v513, %v383
    %v531 = vsel %vm480, %v176, %v385
    %v532 = vsel %vm480, %v177, %v387
    %v533 = vsel %vm480, %v178, %v389
    %v534 = vsel %vm480, %v179, %v391
    %v535 = vsel %vm480, %v180, %v393
    %v536 = vsel %vm480, %v181, %v395
    %v537 = vsel %vm480, %v182, %v397
    %v538 = vsel %vm480, %v183, %v399
    %v539 = vsel %vm480, %v184, %v401
    %v540 = vsel %vm480, %v185, %v403
    %v541 = vsel %vm480, %v186, %v405
    %v542 = vsel %vm480, %v187, %v407
    %v543 = vsel %vm480, %v188, %v409
    %v544 = vsel %vm480, %v189, %v411
    %v545 = vsel %vm480, %v190, %v413
    %v546 = vsel %vm480, %v191, %v415
    %v547 = vsel %vm497, %v531, %v417
    %v548 = vsel %vm497, %v532, %v419
    %v549 = vsel %vm497, %v533, %v421
    %v550 = vsel %vm497, %v534, %v423
    %v551 = vsel %vm497, %v535, %v425
    %v552 = vsel %vm497, %v536, %v427
    %v553 = vsel %vm497, %v537, %v429
    %v554 = vsel %vm497, %v538, %v431
    %v555 = vsel %vm497, %v539, %v433
    %v556 = vsel %vm497, %v540, %v435
    %v557 = vsel %vm497, %v541, %v437
    %v558 = vsel %vm497, %v542, %v439
    %v559 = vsel %vm497, %v543, %v441
    %v560 = vsel %vm497, %v544, %v443
    %v561 = vsel %vm497, %v545, %v445
    %v562 = vsel %vm497, %v546, %v447
    %v563 = vsel %vm514, %v547, %v449
    %v564 = vsel %vm514, %v548, %v451
    %v565 = vsel %vm514, %v549, %v453
    %v566 = vsel %vm514, %v550, %v455
    %v567 = vsel %vm514, %v551, %v457
    %v568 = vsel %vm514, %v552, %v459
    %v569 = vsel %vm514, %v553, %v461
    %v570 = vsel %vm514, %v554, %v463
    %v571 = vsel %vm514, %v555, %v465
    %v572 = vsel %vm514, %v556, %v467
    %v573 = vsel %vm514, %v557, %v469
    %v574 = vsel %vm514, %v558, %v471
    %v575 = vsel %vm514, %v559, %v473
    %v576 = vsel %vm514, %v560, %v475
    %v577 = vsel %vm514, %v561, %v477
    %v578 = vsel %vm514, %v562, %v479
    %v579 = vcvt.s32.f32 %v515
    %v580 = vcvt.s32.f32 %v563
    %v581 = vcvt.s32.f32 %v516
    %v582 = vcvt.s32.f32 %v564
    %v583 = vcvt.s32.f32 %v517
    %v584 = vcvt.s32.f32 %v565
    %v585 = vcvt.s32.f32 %v518
    %v586 = vcvt.s32.f32 %v566
    %v587 = vcvt.s32.f32 %v519
    %v588 = vcvt.s32.f32 %v567
    %v589 = vcvt.s32.f32 %v520
    %v590 = vcvt.s32.f32 %v568
    %v591 = vcvt.s32.f32 %v521
    %v592 = vcvt.s32.f32 %v569
    %v593 = vcvt.s32.f32 %v522
    %v594 = vcvt.s32.f32 %v570
    %v595 = vcvt.s32.f32 %v523
    %v596 = vcvt.s32.f32 %v571
    %v597 = vcvt.s32.f32 %v524
    %v598 = vcvt.s32.f32 %v572
    %v599 = vcvt.s32.f32 %v525
    %v600 = vcvt.s32.f32 %v573
    %v601 = vcvt.s32.f32 %v526
    %v602 = vcvt.s32.f32 %v574
    %v603 = vcvt.s32.f32 %v527
    %v604 = vcvt.s32.f32 %v575
    %v605 = vcvt.s32.f32 %v528
    %v606 = vcvt.s32.f32 %v576
    %v607 = vcvt.s32.f32 %v529
    %v608 = vcvt.s32.f32 %v577
    %v609 = vcvt.s32.f32 %v530
    %v610 = vcvt.s32.f32 %v578
    %v611 = vpack.c.bf16 %v581, %v579
    %v612 = vpack.c.bf16 %v582, %v580
    %v613 = vpack.c.bf16 %v585, %v583
    %v614 = vpack.c.bf16 %v586, %v584
    %v615 = vpack.c.bf16 %v589, %v587
    %v616 = vpack.c.bf16 %v590, %v588
    %v617 = vpack.c.bf16 %v593, %v591
    %v618 = vpack.c.bf16 %v594, %v592
    %v619 = vpack.c.bf16 %v597, %v595
    %v620 = vpack.c.bf16 %v598, %v596
    %v621 = vpack.c.bf16 %v601, %v599
    %v622 = vpack.c.bf16 %v602, %v600
    %v623 = vpack.c.bf16 %v605, %v603
    %v624 = vpack.c.bf16 %v606, %v604
    %v625 = vpack.c.bf16 %v609, %v607
    %v626 = vpack.c.bf16 %v610, %v608
    %v629 = vunpack.c.l.b16 %v30
    %v630 = vunpack.c.l.b16 %v31
    %v631 = vpack.c.b16 %v630, %v629
    %633 = vmatprep.subr.bf16.mxu0 %v626
    %634 = vmatpush1.bf16.msra.mxu0 %v625
    %635 = vmatprep.subr.bf16.mxu0 %v624
    %636 = vmatpush1.bf16.msra.mxu0 %v623
    %637 = vmatprep.subr.bf16.mxu0 %v622
    %638 = vmatpush1.bf16.msra.mxu0 %v621
    %639 = vmatprep.subr.bf16.mxu0 %v620
    %640 = vmatpush1.bf16.msra.mxu0 %v619
    %641 = vmatprep.subr.bf16.mxu0 %v618
    %642 = vmatpush1.bf16.msra.mxu0 %v617
    %643 = vmatprep.subr.bf16.mxu0 %v616
    %644 = vmatpush1.bf16.msra.mxu0 %v615
    %645 = vmatprep.subr.bf16.mxu0 %v614
    %646 = vmatpush1.bf16.msra.mxu0 %v613
    %647 = vmatprep.subr.bf16.mxu0 %v612
    %648 = vmatpush1.bf16.msra.mxu0 %v611
    %649 = vmatprep.subr.bf16.mxu0 0
    %650 = vmatpush2.bf16.msra.mxu0 0
    %651 = vmatprep.subr.bf16.mxu0 0
    %652 = vmatpush2.bf16.msra.mxu0 0
    %653 = vmatprep.subr.bf16.mxu0 0
    %654 = vmatpush2.bf16.msra.mxu0 0
    %655 = vmatprep.subr.bf16.mxu0 0
    %656 = vmatpush2.bf16.msra.mxu0 0
    %657 = vmatprep.subr.bf16.mxu0 0
    %658 = vmatpush2.bf16.msra.mxu0 0
    %659 = vmatprep.subr.bf16.mxu0 0
    %660 = vmatpush2.bf16.msra.mxu0 0
    %661 = vmatprep.subr.bf16.mxu0 0
    %662 = vmatpush2.bf16.msra.mxu0 0
    %663 = vmatprep.subr.bf16.mxu0 0
    %664 = vmatpush2.bf16.msra.mxu0 0
    %665 = vmatprep.mubr.bf16.mxu0 0
    %666 = vmatmul.mubr.bf16.gmra.mxu0 %v631
    %v667 = vpop.f32.mrf.mxu0
    %v668 = vadd.f32 0.0, %v667
    %v669 = vpop.f32.mrf.mxu0
    %v670 = vadd.f32 0.0, %v669
    %v671 = vpop.f32.mrf.mxu0
    %v672 = vadd.f32 0.0, %v671
    %v673 = vpop.f32.mrf.mxu0
    %v674 = vadd.f32 0.0, %v673
    %675 = vdwg.mxu0
    %v676 = vunpack.c.l.bf16 %v30
    %v677 = vunpack.c.l.bf16 %v31
    %678 = vadd.xlane.f32.xlu0 %v676
    %v679 = vpop.xlane.xlu0 %678
    %680 = vadd.xlane.f32.xlu0 %v677
    %v681 = vpop.xlane.xlu0 %680
    %v682 = vld [vmem:[%s2] sm:$0x1]
    %v683 = vand.u32 %v682, 15
    %v684 = vshra.s32 %v682, 4
    %v685 = vand.u32 %v684, 15
    %v686 = vshra.s32 %v682, 8
    %v687 = vand.u32 %v686, 15
    %v688 = vshra.s32 %v682, 12
    %v689 = vand.u32 %v688, 15
    %v690 = vshra.s32 %v682, 16
    %v691 = vand.u32 %v690, 15
    %v692 = vshra.s32 %v682, 20
    %v693 = vand.u32 %v692, 15
    %v694 = vshra.s32 %v682, 24
    %v695 = vand.u32 %v694, 15
    %v696 = vshra.s32 %v682, 28
    %v697 = vand.u32 %v696, 15
    %698 = vrot.lane.b32.xlu0 %v685, 32
    %v699 = vpop.permute.xlu0 %698
    %700 = vrot.lane.b32.xlu0 %v687, 64
    %v701 = vpop.permute.xlu0 %700
    %702 = vrot.lane.b32.xlu0 %v689, 96
    %v703 = vpop.permute.xlu0 %702
    %704 = vrot.lane.b32.xlu0 %v693, 32
    %v705 = vpop.permute.xlu0 %704
    %706 = vrot.lane.b32.xlu0 %v695, 64
    %v707 = vpop.permute.xlu0 %706
    %708 = vrot.lane.b32.xlu0 %v697, 96
    %v709 = vpop.permute.xlu0 %708
    %v710 = vsel %vm480, %v683, %v699
    %v711 = vsel %vm497, %v710, %v701
    %v712 = vsel %vm514, %v711, %v703
    %v713 = vsel %vm480, %v691, %v705
    %v714 = vsel %vm497, %v713, %v707
    %v715 = vsel %vm514, %v714, %v709
    %v716 = vcvt.s32.f32 %v712
    %v717 = vcvt.s32.f32 %v715
    %v718 = vld [vmem:[%s3] ss:$2 sm:$0x3]
    %v719 = vld [vmem:[#allocation2] sm:$0xff]
    %v720 = vld [vmem:[#allocation2 + $0x8] sm:$0xff]
    %v721 = vld [vmem:[#allocation2 + $0x10] sm:$0xff]
    %v722 = vld [vmem:[#allocation2 + $0x18] sm:$0xff]
    %v723 = vlaneseq
    %v724 = vshrl.u32 %v723, 7
    %v725 = vsub.s32 0, %v724
    %v726 = vrot.slane %v716, %v725
    %v727 = vlaneseq
    %v728 = vshrl.u32 %v727, 7
    %v729 = vsub.s32 0, %v728
    %v730 = vrot.slane %v717, %v729
    %v731 = vmul.f32 %v726, %v679
    %v732 = vmul.f32 %v730, %v679
    %v733 = vmul.f32 %v726, %v681
    %v734 = vmul.f32 %v730, %v681
    %v735 = vsub.f32 %v668, %v731
    %v736 = vsub.f32 %v670, %v732
    %v737 = vsub.f32 %v672, %v733
    %v738 = vsub.f32 %v674, %v734
    %v740 = vlaneseq
    %v741 = vshrl.u32 %v740, 7
    %v742 = vsub.s32 0, %v741
    %v743 = vrot.slane %v718, %v742
    %v744 = vlaneseq
    %v745 = vshrl.u32 %v744, 7
    %v746 = vsub.s32 1, %v745
    %v747 = vrot.slane %v718, %v746
    %v750 = vmul.f32 %v743, %v735
    %v751 = vmul.f32 %v747, %v736
    %v752 = vmul.f32 %v743, %v737
    %v753 = vmul.f32 %v747, %v738
    %v754 = vadd.f32 %v719, %v750
    %v755 = vadd.f32 %v720, %v751
    %v756 = vadd.f32 %v721, %v752
    %v757 = vadd.f32 %v722, %v753
    %758 = vst [vmem:[#allocation2] sm:$0xff] %v754
    %759 = vst [vmem:[#allocation2 + $0x8] sm:$0xff] %v755
    %760 = vst [vmem:[#allocation2 + $0x10] sm:$0xff] %v756
    %761 = vst [vmem:[#allocation2 + $0x18] sm:$0xff] %v757
    %v762 = vld [vmem:[%s0 + $0x4] sm:$0xf]
    %v763 = vld [vmem:[%s0 + $0xc] sm:$0xf]
    %v764 = vld [vmem:[%s1 + $0x80] sm:$0xff]
    %v765 = vld [vmem:[%s1 + $0x88] sm:$0xff]
    %v766 = vld [vmem:[%s1 + $0x90] sm:$0xff]
    %v767 = vld [vmem:[%s1 + $0x98] sm:$0xff]
    %v768 = vld [vmem:[%s1 + $0xa0] sm:$0xff]
    %v769 = vld [vmem:[%s1 + $0xa8] sm:$0xff]
    %v770 = vld [vmem:[%s1 + $0xb0] sm:$0xff]
    %v771 = vld [vmem:[%s1 + $0xb8] sm:$0xff]
    %v772 = vld [vmem:[%s1 + $0xc0] sm:$0xff]
    %v773 = vld [vmem:[%s1 + $0xc8] sm:$0xff]
    %v774 = vld [vmem:[%s1 + $0xd0] sm:$0xff]
    %v775 = vld [vmem:[%s1 + $0xd8] sm:$0xff]
    %v776 = vld [vmem:[%s1 + $0xe0] sm:$0xff]
    %v777 = vld [vmem:[%s1 + $0xe8] sm:$0xff]
    %v778 = vld [vmem:[%s1 + $0xf0] sm:$0xff]
    %v779 = vld [vmem:[%s1 + $0xf8] sm:$0xff]
    %v780 = vand.u32 %v764, 15
    %v781 = vand.u32 %v765, 15
    %v782 = vand.u32 %v766, 15
    %v783 = vand.u32 %v767, 15
    %v784 = vand.u32 %v768, 15
    %v785 = vand.u32 %v769, 15
    %v786 = vand.u32 %v770, 15
    %v787 = vand.u32 %v771, 15
    %v788 = vand.u32 %v772, 15
    %v789 = vand.u32 %v773, 15
    %v790 = vand.u32 %v774, 15
    %v791 = vand.u32 %v775, 15
    %v792 = vand.u32 %v776, 15
    %v793 = vand.u32 %v777, 15
    %v794 = vand.u32 %v778, 15
    %v795 = vand.u32 %v779, 15
    %v796 = vshra.s32 %v764, 4
    %v797 = vshra.s32 %v765, 4
    %v798 = vshra.s32 %v766, 4
    %v799 = vshra.s32 %v767, 4
    %v800 = vshra.s32 %v768, 4
    %v801 = vshra.s32 %v769, 4
    %v802 = vshra.s32 %v770, 4
    %v803 = vshra.s32 %v771, 4
    %v804 = vshra.s32 %v772, 4
    %v805 = vshra.s32 %v773, 4
    %v806 = vshra.s32 %v774, 4
    %v807 = vshra.s32 %v775, 4
    %v808 = vshra.s32 %v776, 4
    %v809 = vshra.s32 %v777, 4
    %v810 = vshra.s32 %v778, 4
    %v811 = vshra.s32 %v779, 4
    %v812 = vand.u32 %v796, 15
    %v813 = vand.u32 %v797, 15
    %v814 = vand.u32 %v798, 15
    %v815 = vand.u32 %v799, 15
    %v816 = vand.u32 %v800, 15
    %v817 = vand.u32 %v801, 15
    %v818 = vand.u32 %v802, 15
    %v819 = vand.u32 %v803, 15
    %v820 = vand.u32 %v804, 15
    %v821 = vand.u32 %v805, 15
    %v822 = vand.u32 %v806, 15
    %v823 = vand.u32 %v807, 15
    %v824 = vand.u32 %v808, 15
    %v825 = vand.u32 %v809, 15
    %v826 = vand.u32 %v810, 15
    %v827 = vand.u32 %v811, 15
    %v828 = vshra.s32 %v764, 8
    %v829 = vshra.s32 %v765, 8
    %v830 = vshra.s32 %v766, 8
    %v831 = vshra.s32 %v767, 8
    %v832 = vshra.s32 %v768, 8
    %v833 = vshra.s32 %v769, 8
    %v834 = vshra.s32 %v770, 8
    %v835 = vshra.s32 %v771, 8
    %v836 = vshra.s32 %v772, 8
    %v837 = vshra.s32 %v773, 8
    %v838 = vshra.s32 %v774, 8
    %v839 = vshra.s32 %v775, 8
    %v840 = vshra.s32 %v776, 8
    %v841 = vshra.s32 %v777, 8
    %v842 = vshra.s32 %v778, 8
    %v843 = vshra.s32 %v779, 8
    %v844 = vand.u32 %v828, 15
    %v845 = vand.u32 %v829, 15
    %v846 = vand.u32 %v830, 15
    %v847 = vand.u32 %v831, 15
    %v848 = vand.u32 %v832, 15
    %v849 = vand.u32 %v833, 15
    %v850 = vand.u32 %v834, 15
    %v851 = vand.u32 %v835, 15
    %v852 = vand.u32 %v836, 15
    %v853 = vand.u32 %v837, 15
    %v854 = vand.u32 %v838, 15
    %v855 = vand.u32 %v839, 15
    %v856 = vand.u32 %v840, 15
    %v857 = vand.u32 %v841, 15
    %v858 = vand.u32 %v842, 15
    %v859 = vand.u32 %v843, 15
    %v860 = vshra.s32 %v764, 12
    %v861 = vshra.s32 %v765, 12
    %v862 = vshra.s32 %v766, 12
    %v863 = vshra.s32 %v767, 12
    %v864 = vshra.s32 %v768, 12
    %v865 = vshra.s32 %v769, 12
    %v866 = vshra.s32 %v770, 12
    %v867 = vshra.s32 %v771, 12
    %v868 = vshra.s32 %v772, 12
    %v869 = vshra.s32 %v773, 12
    %v870 = vshra.s32 %v774, 12
    %v871 = vshra.s32 %v775, 12
    %v872 = vshra.s32 %v776, 12
    %v873 = vshra.s32 %v777, 12
    %v874 = vshra.s32 %v778, 12
    %v875 = vshra.s32 %v779, 12
    %v876 = vand.u32 %v860, 15
    %v877 = vand.u32 %v861, 15
    %v878 = vand.u32 %v862, 15
    %v879 = vand.u32 %v863, 15
    %v880 = vand.u32 %v864, 15
    %v881 = vand.u32 %v865, 15
    %v882 = vand.u32 %v866, 15
    %v883 = vand.u32 %v867, 15
    %v884 = vand.u32 %v868, 15
    %v885 = vand.u32 %v869, 15
    %v886 = vand.u32 %v870, 15
    %v887 = vand.u32 %v871, 15
    %v888 = vand.u32 %v872, 15
    %v889 = vand.u32 %v873, 15
    %v890 = vand.u32 %v874, 15
    %v891 = vand.u32 %v875, 15
    %v892 = vshra.s32 %v764, 16
    %v893 = vshra.s32 %v765, 16
    %v894 = vshra.s32 %v766, 16
    %v895 = vshra.s32 %v767, 16
    %v896 = vshra.s32 %v768, 16
    %v897 = vshra.s32 %v769, 16
    %v898 = vshra.s32 %v770, 16
    %v899 = vshra.s32 %v771, 16
    %v900 = vshra.s32 %v772, 16
    %v901 = vshra.s32 %v773, 16
    %v902 = vshra.s32 %v774, 16
    %v903 = vshra.s32 %v775, 16
    %v904 = vshra.s32 %v776, 16
    %v905 = vshra.s32 %v777, 16
    %v906 = vshra.s32 %v778, 16
    %v907 = vshra.s32 %v779, 16
    %v908 = vand.u32 %v892, 15
    %v909 = vand.u32 %v893, 15
    %v910 = vand.u32 %v894, 15
    %v911 = vand.u32 %v895, 15
    %v912 = vand.u32 %v896, 15
    %v913 = vand.u32 %v897, 15
    %v914 = vand.u32 %v898, 15
    %v915 = vand.u32 %v899, 15
    %v916 = vand.u32 %v900, 15
    %v917 = vand.u32 %v901, 15
    %v918 = vand.u32 %v902, 15
    %v919 = vand.u32 %v903, 15
    %v920 = vand.u32 %v904, 15
    %v921 = vand.u32 %v905, 15
    %v922 = vand.u32 %v906, 15
    %v923 = vand.u32 %v907, 15
    %v924 = vshra.s32 %v764, 20
    %v925 = vshra.s32 %v765, 20
    %v926 = vshra.s32 %v766, 20
    %v927 = vshra.s32 %v767, 20
    %v928 = vshra.s32 %v768, 20
    %v929 = vshra.s32 %v769, 20
    %v930 = vshra.s32 %v770, 20
    %v931 = vshra.s32 %v771, 20
    %v932 = vshra.s32 %v772, 20
    %v933 = vshra.s32 %v773, 20
    %v934 = vshra.s32 %v774, 20
    %v935 = vshra.s32 %v775, 20
    %v936 = vshra.s32 %v776, 20
    %v937 = vshra.s32 %v777, 20
    %v938 = vshra.s32 %v778, 20
    %v939 = vshra.s32 %v779, 20
    %v940 = vand.u32 %v924, 15
    %v941 = vand.u32 %v925, 15
    %v942 = vand.u32 %v926, 15
    %v943 = vand.u32 %v927, 15
    %v944 = vand.u32 %v928, 15
    %v945 = vand.u32 %v929, 15
    %v946 = vand.u32 %v930, 15
    %v947 = vand.u32 %v931, 15
    %v948 = vand.u32 %v932, 15
    %v949 = vand.u32 %v933, 15
    %v950 = vand.u32 %v934, 15
    %v951 = vand.u32 %v935, 15
    %v952 = vand.u32 %v936, 15
    %v953 = vand.u32 %v937, 15
    %v954 = vand.u32 %v938, 15
    %v955 = vand.u32 %v939, 15
    %v956 = vshra.s32 %v764, 24
    %v957 = vshra.s32 %v765, 24
    %v958 = vshra.s32 %v766, 24
    %v959 = vshra.s32 %v767, 24
    %v960 = vshra.s32 %v768, 24
    %v961 = vshra.s32 %v769, 24
    %v962 = vshra.s32 %v770, 24
    %v963 = vshra.s32 %v771, 24
    %v964 = vshra.s32 %v772, 24
    %v965 = vshra.s32 %v773, 24
    %v966 = vshra.s32 %v774, 24
    %v967 = vshra.s32 %v775, 24
    %v968 = vshra.s32 %v776, 24
    %v969 = vshra.s32 %v777, 24
    %v970 = vshra.s32 %v778, 24
    %v971 = vshra.s32 %v779, 24
    %v972 = vand.u32 %v956, 15
    %v973 = vand.u32 %v957, 15
    %v974 = vand.u32 %v958, 15
    %v975 = vand.u32 %v959, 15
    %v976 = vand.u32 %v960, 15
    %v977 = vand.u32 %v961, 15
    %v978 = vand.u32 %v962, 15
    %v979 = vand.u32 %v963, 15
    %v980 = vand.u32 %v964, 15
    %v981 = vand.u32 %v965, 15
    %v982 = vand.u32 %v966, 15
    %v983 = vand.u32 %v967, 15
    %v984 = vand.u32 %v968, 15
    %v985 = vand.u32 %v969, 15
    %v986 = vand.u32 %v970, 15
    %v987 = vand.u32 %v971, 15
    %v988 = vshra.s32 %v764, 28
    %v989 = vshra.s32 %v765, 28
    %v990 = vshra.s32 %v766, 28
    %v991 = vshra.s32 %v767, 28
    %v992 = vshra.s32 %v768, 28
    %v993 = vshra.s32 %v769, 28
    %v994 = vshra.s32 %v770, 28
    %v995 = vshra.s32 %v771, 28
    %v996 = vshra.s32 %v772, 28
    %v997 = vshra.s32 %v773, 28
    %v998 = vshra.s32 %v774, 28
    %v999 = vshra.s32 %v775, 28
    %v1000 = vshra.s32 %v776, 28
    %v1001 = vshra.s32 %v777, 28
    %v1002 = vshra.s32 %v778, 28
    %v1003 = vshra.s32 %v779, 28
    %v1004 = vand.u32 %v988, 15
    %v1005 = vand.u32 %v989, 15
    %v1006 = vand.u32 %v990, 15
    %v1007 = vand.u32 %v991, 15
    %v1008 = vand.u32 %v992, 15
    %v1009 = vand.u32 %v993, 15
    %v1010 = vand.u32 %v994, 15
    %v1011 = vand.u32 %v995, 15
    %v1012 = vand.u32 %v996, 15
    %v1013 = vand.u32 %v997, 15
    %v1014 = vand.u32 %v998, 15
    %v1015 = vand.u32 %v999, 15
    %v1016 = vand.u32 %v1000, 15
    %v1017 = vand.u32 %v1001, 15
    %v1018 = vand.u32 %v1002, 15
    %v1019 = vand.u32 %v1003, 15
    %1020 = vrot.lane.b32.xlu0 %v812, 32
    %v1021 = vpop.permute.xlu0 %1020
    %1022 = vrot.lane.b32.xlu0 %v813, 32
    %v1023 = vpop.permute.xlu0 %1022
    %1024 = vrot.lane.b32.xlu0 %v814, 32
    %v1025 = vpop.permute.xlu0 %1024
    %1026 = vrot.lane.b32.xlu0 %v815, 32
    %v1027 = vpop.permute.xlu0 %1026
    %1028 = vrot.lane.b32.xlu0 %v816, 32
    %v1029 = vpop.permute.xlu0 %1028
    %1030 = vrot.lane.b32.xlu0 %v817, 32
    %v1031 = vpop.permute.xlu0 %1030
    %1032 = vrot.lane.b32.xlu0 %v818, 32
    %v1033 = vpop.permute.xlu0 %1032
    %1034 = vrot.lane.b32.xlu0 %v819, 32
    %v1035 = vpop.permute.xlu0 %1034
    %1036 = vrot.lane.b32.xlu0 %v820, 32
    %v1037 = vpop.permute.xlu0 %1036
    %1038 = vrot.lane.b32.xlu0 %v821, 32
    %v1039 = vpop.permute.xlu0 %1038
    %1040 = vrot.lane.b32.xlu0 %v822, 32
    %v1041 = vpop.permute.xlu0 %1040
    %1042 = vrot.lane.b32.xlu0 %v823, 32
    %v1043 = vpop.permute.xlu0 %1042
    %1044 = vrot.lane.b32.xlu0 %v824, 32
    %v1045 = vpop.permute.xlu0 %1044
    %1046 = vrot.lane.b32.xlu0 %v825, 32
    %v1047 = vpop.permute.xlu0 %1046
    %1048 = vrot.lane.b32.xlu0 %v826, 32
    %v1049 = vpop.permute.xlu0 %1048
    %1050 = vrot.lane.b32.xlu0 %v827, 32
    %v1051 = vpop.permute.xlu0 %1050
    %1052 = vrot.lane.b32.xlu0 %v844, 64
    %v1053 = vpop.permute.xlu0 %1052
    %1054 = vrot.lane.b32.xlu0 %v845, 64
    %v1055 = vpop.permute.xlu0 %1054
    %1056 = vrot.lane.b32.xlu0 %v846, 64
    %v1057 = vpop.permute.xlu0 %1056
    %1058 = vrot.lane.b32.xlu0 %v847, 64
    %v1059 = vpop.permute.xlu0 %1058
    %1060 = vrot.lane.b32.xlu0 %v848, 64
    %v1061 = vpop.permute.xlu0 %1060
    %1062 = vrot.lane.b32.xlu0 %v849, 64
    %v1063 = vpop.permute.xlu0 %1062
    %1064 = vrot.lane.b32.xlu0 %v850, 64
    %v1065 = vpop.permute.xlu0 %1064
    %1066 = vrot.lane.b32.xlu0 %v851, 64
    %v1067 = vpop.permute.xlu0 %1066
    %1068 = vrot.lane.b32.xlu0 %v852, 64
    %v1069 = vpop.permute.xlu0 %1068
    %1070 = vrot.lane.b32.xlu0 %v853, 64
    %v1071 = vpop.permute.xlu0 %1070
    %1072 = vrot.lane.b32.xlu0 %v854, 64
    %v1073 = vpop.permute.xlu0 %1072
    %1074 = vrot.lane.b32.xlu0 %v855, 64
    %v1075 = vpop.permute.xlu0 %1074
    %1076 = vrot.lane.b32.xlu0 %v856, 64
    %v1077 = vpop.permute.xlu0 %1076
    %1078 = vrot.lane.b32.xlu0 %v857, 64
    %v1079 = vpop.permute.xlu0 %1078
    %1080 = vrot.lane.b32.xlu0 %v858, 64
    %v1081 = vpop.permute.xlu0 %1080
    %1082 = vrot.lane.b32.xlu0 %v859, 64
    %v1083 = vpop.permute.xlu0 %1082
    %1084 = vrot.lane.b32.xlu0 %v876, 96
    %v1085 = vpop.permute.xlu0 %1084
    %1086 = vrot.lane.b32.xlu0 %v877, 96
    %v1087 = vpop.permute.xlu0 %1086
    %1088 = vrot.lane.b32.xlu0 %v878, 96
    %v1089 = vpop.permute.xlu0 %1088
    %1090 = vrot.lane.b32.xlu0 %v879, 96
    %v1091 = vpop.permute.xlu0 %1090
    %1092 = vrot.lane.b32.xlu0 %v880, 96
    %v1093 = vpop.permute.xlu0 %1092
    %1094 = vrot.lane.b32.xlu0 %v881, 96
    %v1095 = vpop.permute.xlu0 %1094
    %1096 = vrot.lane.b32.xlu0 %v882, 96
    %v1097 = vpop.permute.xlu0 %1096
    %1098 = vrot.lane.b32.xlu0 %v883, 96
    %v1099 = vpop.permute.xlu0 %1098
    %1100 = vrot.lane.b32.xlu0 %v884, 96
    %v1101 = vpop.permute.xlu0 %1100
    %1102 = vrot.lane.b32.xlu0 %v885, 96
    %v1103 = vpop.permute.xlu0 %1102
    %1104 = vrot.lane.b32.xlu0 %v886, 96
    %v1105 = vpop.permute.xlu0 %1104
    %1106 = vrot.lane.b32.xlu0 %v887, 96
    %v1107 = vpop.permute.xlu0 %1106
    %1108 = vrot.lane.b32.xlu0 %v888, 96
    %v1109 = vpop.permute.xlu0 %1108
    %1110 = vrot.lane.b32.xlu0 %v889, 96
    %v1111 = vpop.permute.xlu0 %1110
    %1112 = vrot.lane.b32.xlu0 %v890, 96
    %v1113 = vpop.permute.xlu0 %1112
    %1114 = vrot.lane.b32.xlu0 %v891, 96
    %v1115 = vpop.permute.xlu0 %1114
    %1116 = vrot.lane.b32.xlu0 %v940, 32
    %v1117 = vpop.permute.xlu0 %1116
    %1118 = vrot.lane.b32.xlu0 %v941, 32
    %v1119 = vpop.permute.xlu0 %1118
    %1120 = vrot.lane.b32.xlu0 %v942, 32
    %v1121 = vpop.permute.xlu0 %1120
    %1122 = vrot.lane.b32.xlu0 %v943, 32
    %v1123 = vpop.permute.xlu0 %1122
    %1124 = vrot.lane.b32.xlu0 %v944, 32
    %v1125 = vpop.permute.xlu0 %1124
    %1126 = vrot.lane.b32.xlu0 %v945, 32
    %v1127 = vpop.permute.xlu0 %1126
    %1128 = vrot.lane.b32.xlu0 %v946, 32
    %v1129 = vpop.permute.xlu0 %1128
    %1130 = vrot.lane.b32.xlu0 %v947, 32
    %v1131 = vpop.permute.xlu0 %1130
    %1132 = vrot.lane.b32.xlu0 %v948, 32
    %v1133 = vpop.permute.xlu0 %1132
    %1134 = vrot.lane.b32.xlu0 %v949, 32
    %v1135 = vpop.permute.xlu0 %1134
    %1136 = vrot.lane.b32.xlu0 %v950, 32
    %v1137 = vpop.permute.xlu0 %1136
    %1138 = vrot.lane.b32.xlu0 %v951, 32
    %v1139 = vpop.permute.xlu0 %1138
    %1140 = vrot.lane.b32.xlu0 %v952, 32
    %v1141 = vpop.permute.xlu0 %1140
    %1142 = vrot.lane.b32.xlu0 %v953, 32
    %v1143 = vpop.permute.xlu0 %1142
    %1144 = vrot.lane.b32.xlu0 %v954, 32
    %v1145 = vpop.permute.xlu0 %1144
    %1146 = vrot.lane.b32.xlu0 %v955, 32
    %v1147 = vpop.permute.xlu0 %1146
    %1148 = vrot.lane.b32.xlu0 %v972, 64
    %v1149 = vpop.permute.xlu0 %1148
    %1150 = vrot.lane.b32.xlu0 %v973, 64
    %v1151 = vpop.permute.xlu0 %1150
    %1152 = vrot.lane.b32.xlu0 %v974, 64
    %v1153 = vpop.permute.xlu0 %1152
    %1154 = vrot.lane.b32.xlu0 %v975, 64
    %v1155 = vpop.permute.xlu0 %1154
    %1156 = vrot.lane.b32.xlu0 %v976, 64
    %v1157 = vpop.permute.xlu0 %1156
    %1158 = vrot.lane.b32.xlu0 %v977, 64
    %v1159 = vpop.permute.xlu0 %1158
    %1160 = vrot.lane.b32.xlu0 %v978, 64
    %v1161 = vpop.permute.xlu0 %1160
    %1162 = vrot.lane.b32.xlu0 %v979, 64
    %v1163 = vpop.permute.xlu0 %1162
    %1164 = vrot.lane.b32.xlu0 %v980, 64
    %v1165 = vpop.permute.xlu0 %1164
    %1166 = vrot.lane.b32.xlu0 %v981, 64
    %v1167 = vpop.permute.xlu0 %1166
    %1168 = vrot.lane.b32.xlu0 %v982, 64
    %v1169 = vpop.permute.xlu0 %1168
    %1170 = vrot.lane.b32.xlu0 %v983, 64
    %v1171 = vpop.permute.xlu0 %1170
    %1172 = vrot.lane.b32.xlu0 %v984, 64
    %v1173 = vpop.permute.xlu0 %1172
    %1174 = vrot.lane.b32.xlu0 %v985, 64
    %v1175 = vpop.permute.xlu0 %1174
    %1176 = vrot.lane.b32.xlu0 %v986, 64
    %v1177 = vpop.permute.xlu0 %1176
    %1178 = vrot.lane.b32.xlu0 %v987, 64
    %v1179 = vpop.permute.xlu0 %1178
    %1180 = vrot.lane.b32.xlu0 %v1004, 96
    %v1181 = vpop.permute.xlu0 %1180
    %1182 = vrot.lane.b32.xlu0 %v1005, 96
    %v1183 = vpop.permute.xlu0 %1182
    %1184 = vrot.lane.b32.xlu0 %v1006, 96
    %v1185 = vpop.permute.xlu0 %1184
    %1186 = vrot.lane.b32.xlu0 %v1007, 96
    %v1187 = vpop.permute.xlu0 %1186
    %1188 = vrot.lane.b32.xlu0 %v1008, 96
    %v1189 = vpop.permute.xlu0 %1188
    %1190 = vrot.lane.b32.xlu0 %v1009, 96
    %v1191 = vpop.permute.xlu0 %1190
    %1192 = vrot.lane.b32.xlu0 %v1010, 96
    %v1193 = vpop.permute.xlu0 %1192
    %1194 = vrot.lane.b32.xlu0 %v1011, 96
    %v1195 = vpop.permute.xlu0 %1194
    %1196 = vrot.lane.b32.xlu0 %v1012, 96
    %v1197 = vpop.permute.xlu0 %1196
    %1198 = vrot.lane.b32.xlu0 %v1013, 96
    %v1199 = vpop.permute.xlu0 %1198
    %1200 = vrot.lane.b32.xlu0 %v1014, 96
    %v1201 = vpop.permute.xlu0 %1200
    %1202 = vrot.lane.b32.xlu0 %v1015, 96
    %v1203 = vpop.permute.xlu0 %1202
    %1204 = vrot.lane.b32.xlu0 %v1016, 96
    %v1205 = vpop.permute.xlu0 %1204
    %1206 = vrot.lane.b32.xlu0 %v1017, 96
    %v1207 = vpop.permute.xlu0 %1206
    %1208 = vrot.lane.b32.xlu0 %v1018, 96
    %v1209 = vpop.permute.xlu0 %1208
    %1210 = vrot.lane.b32.xlu0 %v1019, 96
    %v1211 = vpop.permute.xlu0 %1210
    %v1212 = vsel %vm480, %v780, %v1021
    %v1213 = vsel %vm480, %v781, %v1023
    %v1214 = vsel %vm480, %v782, %v1025
    %v1215 = vsel %vm480, %v783, %v1027
    %v1216 = vsel %vm480, %v784, %v1029
    %v1217 = vsel %vm480, %v785, %v1031
    %v1218 = vsel %vm480, %v786, %v1033
    %v1219 = vsel %vm480, %v787, %v1035
    %v1220 = vsel %vm480, %v788, %v1037
    %v1221 = vsel %vm480, %v789, %v1039
    %v1222 = vsel %vm480, %v790, %v1041
    %v1223 = vsel %vm480, %v791, %v1043
    %v1224 = vsel %vm480, %v792, %v1045
    %v1225 = vsel %vm480, %v793, %v1047
    %v1226 = vsel %vm480, %v794, %v1049
    %v1227 = vsel %vm480, %v795, %v1051
    %v1228 = vsel %vm497, %v1212, %v1053
    %v1229 = vsel %vm497, %v1213, %v1055
    %v1230 = vsel %vm497, %v1214, %v1057
    %v1231 = vsel %vm497, %v1215, %v1059
    %v1232 = vsel %vm497, %v1216, %v1061
    %v1233 = vsel %vm497, %v1217, %v1063
    %v1234 = vsel %vm497, %v1218, %v1065
    %v1235 = vsel %vm497, %v1219, %v1067
    %v1236 = vsel %vm497, %v1220, %v1069
    %v1237 = vsel %vm497, %v1221, %v1071
    %v1238 = vsel %vm497, %v1222, %v1073
    %v1239 = vsel %vm497, %v1223, %v1075
    %v1240 = vsel %vm497, %v1224, %v1077
    %v1241 = vsel %vm497, %v1225, %v1079
    %v1242 = vsel %vm497, %v1226, %v1081
    %v1243 = vsel %vm497, %v1227, %v1083
    %v1244 = vsel %vm514, %v1228, %v1085
    %v1245 = vsel %vm514, %v1229, %v1087
    %v1246 = vsel %vm514, %v1230, %v1089
    %v1247 = vsel %vm514, %v1231, %v1091
    %v1248 = vsel %vm514, %v1232, %v1093
    %v1249 = vsel %vm514, %v1233, %v1095
    %v1250 = vsel %vm514, %v1234, %v1097
    %v1251 = vsel %vm514, %v1235, %v1099
    %v1252 = vsel %vm514, %v1236, %v1101
    %v1253 = vsel %vm514, %v1237, %v1103
    %v1254 = vsel %vm514, %v1238, %v1105
    %v1255 = vsel %vm514, %v1239, %v1107
    %v1256 = vsel %vm514, %v1240, %v1109
    %v1257 = vsel %vm514, %v1241, %v1111
    %v1258 = vsel %vm514, %v1242, %v1113
    %v1259 = vsel %vm514, %v1243, %v1115
    %v1260 = vsel %vm480, %v908, %v1117
    %v1261 = vsel %vm480, %v909, %v1119
    %v1262 = vsel %vm480, %v910, %v1121
    %v1263 = vsel %vm480, %v911, %v1123
    %v1264 = vsel %vm480, %v912, %v1125
    %v1265 = vsel %vm480, %v913, %v1127
    %v1266 = vsel %vm480, %v914, %v1129
    %v1267 = vsel %vm480, %v915, %v1131
    %v1268 = vsel %vm480, %v916, %v1133
    %v1269 = vsel %vm480, %v917, %v1135
    %v1270 = vsel %vm480, %v918, %v1137
    %v1271 = vsel %vm480, %v919, %v1139
    %v1272 = vsel %vm480, %v920, %v1141
    %v1273 = vsel %vm480, %v921, %v1143
    %v1274 = vsel %vm480, %v922, %v1145
    %v1275 = vsel %vm480, %v923, %v1147
    %v1276 = vsel %vm497, %v1260, %v1149
    %v1277 = vsel %vm497, %v1261, %v1151
    %v1278 = vsel %vm497, %v1262, %v1153
    %v1279 = vsel %vm497, %v1263, %v1155
    %v1280 = vsel %vm497, %v1264, %v1157
    %v1281 = vsel %vm497, %v1265, %v1159
    %v1282 = vsel %vm497, %v1266, %v1161
    %v1283 = vsel %vm497, %v1267, %v1163
    %v1284 = vsel %vm497, %v1268, %v1165
    %v1285 = vsel %vm497, %v1269, %v1167
    %v1286 = vsel %vm497, %v1270, %v1169
    %v1287 = vsel %vm497, %v1271, %v1171
    %v1288 = vsel %vm497, %v1272, %v1173
    %v1289 = vsel %vm497, %v1273, %v1175
    %v1290 = vsel %vm497, %v1274, %v1177
    %v1291 = vsel %vm497, %v1275, %v1179
    %v1292 = vsel %vm514, %v1276, %v1181
    %v1293 = vsel %vm514, %v1277, %v1183
    %v1294 = vsel %vm514, %v1278, %v1185
    %v1295 = vsel %vm514, %v1279, %v1187
    %v1296 = vsel %vm514, %v1280, %v1189
    %v1297 = vsel %vm514, %v1281, %v1191
    %v1298 = vsel %vm514, %v1282, %v1193
    %v1299 = vsel %vm514, %v1283, %v1195
    %v1300 = vsel %vm514, %v1284, %v1197
    %v1301 = vsel %vm514, %v1285, %v1199
    %v1302 = vsel %vm514, %v1286, %v1201
    %v1303 = vsel %vm514, %v1287, %v1203
    %v1304 = vsel %vm514, %v1288, %v1205
    %v1305 = vsel %vm514, %v1289, %v1207
    %v1306 = vsel %vm514, %v1290, %v1209
    %v1307 = vsel %vm514, %v1291, %v1211
    %v1308 = vcvt.s32.f32 %v1244
    %v1309 = vcvt.s32.f32 %v1292
    %v1310 = vcvt.s32.f32 %v1245
    %v1311 = vcvt.s32.f32 %v1293
    %v1312 = vcvt.s32.f32 %v1246
    %v1313 = vcvt.s32.f32 %v1294
    %v1314 = vcvt.s32.f32 %v1247
    %v1315 = vcvt.s32.f32 %v1295
    %v1316 = vcvt.s32.f32 %v1248
    %v1317 = vcvt.s32.f32 %v1296
    %v1318 = vcvt.s32.f32 %v1249
    %v1319 = vcvt.s32.f32 %v1297
    %v1320 = vcvt.s32.f32 %v1250
    %v1321 = vcvt.s32.f32 %v1298
    %v1322 = vcvt.s32.f32 %v1251
    %v1323 = vcvt.s32.f32 %v1299
    %v1324 = vcvt.s32.f32 %v1252
    %v1325 = vcvt.s32.f32 %v1300
    %v1326 = vcvt.s32.f32 %v1253
    %v1327 = vcvt.s32.f32 %v1301
    %v1328 = vcvt.s32.f32 %v1254
    %v1329 = vcvt.s32.f32 %v1302
    %v1330 = vcvt.s32.f32 %v1255
    %v1331 = vcvt.s32.f32 %v1303
    %v1332 = vcvt.s32.f32 %v1256
    %v1333 = vcvt.s32.f32 %v1304
    %v1334 = vcvt.s32.f32 %v1257
    %v1335 = vcvt.s32.f32 %v1305
    %v1336 = vcvt.s32.f32 %v1258
    %v1337 = vcvt.s32.f32 %v1306
    %v1338 = vcvt.s32.f32 %v1259
    %v1339 = vcvt.s32.f32 %v1307
    %v1340 = vpack.c.bf16 %v1310, %v1308
    %v1341 = vpack.c.bf16 %v1311, %v1309
    %v1342 = vpack.c.bf16 %v1314, %v1312
    %v1343 = vpack.c.bf16 %v1315, %v1313
    %v1344 = vpack.c.bf16 %v1318, %v1316
    %v1345 = vpack.c.bf16 %v1319, %v1317
    %v1346 = vpack.c.bf16 %v1322, %v1320
    %v1347 = vpack.c.bf16 %v1323, %v1321
    %v1348 = vpack.c.bf16 %v1326, %v1324
    %v1349 = vpack.c.bf16 %v1327, %v1325
    %v1350 = vpack.c.bf16 %v1330, %v1328
    %v1351 = vpack.c.bf16 %v1331, %v1329
    %v1352 = vpack.c.bf16 %v1334, %v1332
    %v1353 = vpack.c.bf16 %v1335, %v1333
    %v1354 = vpack.c.bf16 %v1338, %v1336
    %v1355 = vpack.c.bf16 %v1339, %v1337
    %v1358 = vunpack.c.l.b16 %v762
    %v1359 = vunpack.c.l.b16 %v763
    %v1360 = vpack.c.b16 %v1359, %v1358
    %1362 = vmatprep.subr.bf16.mxu0 %v1355
    %1363 = vmatpush1.bf16.msra.mxu0 %v1354
    %1364 = vmatprep.subr.bf16.mxu0 %v1353
    %1365 = vmatpush1.bf16.msra.mxu0 %v1352
    %1366 = vmatprep.subr.bf16.mxu0 %v1351
    %1367 = vmatpush1.bf16.msra.mxu0 %v1350
    %1368 = vmatprep.subr.bf16.mxu0 %v1349
    %1369 = vmatpush1.bf16.msra.mxu0 %v1348
    %1370 = vmatprep.subr.bf16.mxu0 %v1347
    %1371 = vmatpush1.bf16.msra.mxu0 %v1346
    %1372 = vmatprep.subr.bf16.mxu0 %v1345
    %1373 = vmatpush1.bf16.msra.mxu0 %v1344
    %1374 = vmatprep.subr.bf16.mxu0 %v1343
    %1375 = vmatpush1.bf16.msra.mxu0 %v1342
    %1376 = vmatprep.subr.bf16.mxu0 %v1341
    %1377 = vmatpush1.bf16.msra.mxu0 %v1340
    %1378 = vmatprep.subr.bf16.mxu0 0
    %1379 = vmatpush2.bf16.msra.mxu0 0
    %1380 = vmatprep.subr.bf16.mxu0 0
    %1381 = vmatpush2.bf16.msra.mxu0 0
    %1382 = vmatprep.subr.bf16.mxu0 0
    %1383 = vmatpush2.bf16.msra.mxu0 0
    %1384 = vmatprep.subr.bf16.mxu0 0
    %1385 = vmatpush2.bf16.msra.mxu0 0
    %1386 = vmatprep.subr.bf16.mxu0 0
    %1387 = vmatpush2.bf16.msra.mxu0 0
    %1388 = vmatprep.subr.bf16.mxu0 0
    %1389 = vmatpush2.bf16.msra.mxu0 0
    %1390 = vmatprep.subr.bf16.mxu0 0
    %1391 = vmatpush2.bf16.msra.mxu0 0
    %1392 = vmatprep.subr.bf16.mxu0 0
    %1393 = vmatpush2.bf16.msra.mxu0 0
    %1394 = vmatprep.mubr.bf16.mxu0 0
    %1395 = vmatmul.mubr.bf16.gmra.mxu0 %v1360
    %v1396 = vpop.f32.mrf.mxu0
    %v1397 = vadd.f32 0.0, %v1396
    %v1398 = vpop.f32.mrf.mxu0
    %v1399 = vadd.f32 0.0, %v1398
    %v1400 = vpop.f32.mrf.mxu0
    %v1401 = vadd.f32 0.0, %v1400
    %v1402 = vpop.f32.mrf.mxu0
    %v1403 = vadd.f32 0.0, %v1402
    %1404 = vdwg.mxu0
    %v1405 = vunpack.c.l.bf16 %v762
    %v1406 = vunpack.c.l.bf16 %v763
    %1407 = vadd.xlane.f32.xlu0 %v1405
    %v1408 = vpop.xlane.xlu0 %1407
    %1409 = vadd.xlane.f32.xlu0 %v1406
    %v1410 = vpop.xlane.xlu0 %1409
    %v1411 = vld [vmem:[%s2 + $0x1] sm:$0x1]
    %v1412 = vand.u32 %v1411, 15
    %v1413 = vshra.s32 %v1411, 4
    %v1414 = vand.u32 %v1413, 15
    %v1415 = vshra.s32 %v1411, 8
    %v1416 = vand.u32 %v1415, 15
    %v1417 = vshra.s32 %v1411, 12
    %v1418 = vand.u32 %v1417, 15
    %v1419 = vshra.s32 %v1411, 16
    %v1420 = vand.u32 %v1419, 15
    %v1421 = vshra.s32 %v1411, 20
    %v1422 = vand.u32 %v1421, 15
    %v1423 = vshra.s32 %v1411, 24
    %v1424 = vand.u32 %v1423, 15
    %v1425 = vshra.s32 %v1411, 28
    %v1426 = vand.u32 %v1425, 15
    %1427 = vrot.lane.b32.xlu0 %v1414, 32
    %v1428 = vpop.permute.xlu0 %1427
    %1429 = vrot.lane.b32.xlu0 %v1416, 64
    %v1430 = vpop.permute.xlu0 %1429
    %1431 = vrot.lane.b32.xlu0 %v1418, 96
    %v1432 = vpop.permute.xlu0 %1431
    %1433 = vrot.lane.b32.xlu0 %v1422, 32
    %v1434 = vpop.permute.xlu0 %1433
    %1435 = vrot.lane.b32.xlu0 %v1424, 64
    %v1436 = vpop.permute.xlu0 %1435
    %1437 = vrot.lane.b32.xlu0 %v1426, 96
    %v1438 = vpop.permute.xlu0 %1437
    %v1439 = vsel %vm480, %v1412, %v1428
    %v1440 = vsel %vm497, %v1439, %v1430
    %v1441 = vsel %vm514, %v1440, %v1432
    %v1442 = vsel %vm480, %v1420, %v1434
    %v1443 = vsel %vm497, %v1442, %v1436
    %v1444 = vsel %vm514, %v1443, %v1438
    %v1445 = vcvt.s32.f32 %v1441
    %v1446 = vcvt.s32.f32 %v1444
    %s1447 = scalar_lea.vmem %s3, 1
    %v1448 = vld [vmem:[%s1447] ss:$2 sm:$0x3]
    %v1449 = vld [vmem:[#allocation2] sm:$0xff]
    %v1450 = vld [vmem:[#allocation2 + $0x8] sm:$0xff]
    %v1451 = vld [vmem:[#allocation2 + $0x10] sm:$0xff]
    %v1452 = vld [vmem:[#allocation2 + $0x18] sm:$0xff]
    %v1453 = vlaneseq
    %v1454 = vshrl.u32 %v1453, 7
    %v1455 = vsub.s32 0, %v1454
    %v1456 = vrot.slane %v1445, %v1455
    %v1457 = vlaneseq
    %v1458 = vshrl.u32 %v1457, 7
    %v1459 = vsub.s32 0, %v1458
    %v1460 = vrot.slane %v1446, %v1459
    %v1461 = vmul.f32 %v1456, %v1408
    %v1462 = vmul.f32 %v1460, %v1408
    %v1463 = vmul.f32 %v1456, %v1410
    %v1464 = vmul.f32 %v1460, %v1410
    %v1465 = vsub.f32 %v1397, %v1461
    %v1466 = vsub.f32 %v1399, %v1462
    %v1467 = vsub.f32 %v1401, %v1463
    %v1468 = vsub.f32 %v1403, %v1464
    %v1470 = vlaneseq
    %v1471 = vshrl.u32 %v1470, 7
    %v1472 = vsub.s32 0, %v1471
    %v1473 = vrot.slane %v1448, %v1472
    %v1474 = vlaneseq
    %v1475 = vshrl.u32 %v1474, 7
    %v1476 = vsub.s32 1, %v1475
    %v1477 = vrot.slane %v1448, %v1476
    %v1480 = vmul.f32 %v1473, %v1465
    %v1481 = vmul.f32 %v1477, %v1466
    %v1482 = vmul.f32 %v1473, %v1467
    %v1483 = vmul.f32 %v1477, %v1468
    %v1484 = vadd.f32 %v1449, %v1480
    %v1485 = vadd.f32 %v1450, %v1481
    %v1486 = vadd.f32 %v1451, %v1482
    %v1487 = vadd.f32 %v1452, %v1483
    %1488 = vst [vmem:[#allocation2] sm:$0xff] %v1484
    %1489 = vst [vmem:[#allocation2 + $0x8] sm:$0xff] %v1485
    %1490 = vst [vmem:[#allocation2 + $0x10] sm:$0xff] %v1486
    %1491 = vst [vmem:[#allocation2 + $0x18] sm:$0xff] %v1487
    // Predicated region
    $region26: #{tpu_custom_call.1} parent=1 // pred_check
      %p1492 = pneg %p22
    $region27: #{tpu_custom_call.1} parent=1 // pred_check_branch
      %1494 = sbr.rel (%p1492) target = $region29
    $region28: #{tpu_custom_call.1} parent=1 // pred_region
      %v1495 = vld [vmem:[#allocation2] sm:$0xff]
      %v1496 = vld [vmem:[#allocation2 + $0x8] sm:$0xff]
      %v1497 = vld [vmem:[#allocation2 + $0x10] sm:$0xff]
      %v1498 = vld [vmem:[#allocation2 + $0x18] sm:$0xff]
      %v1499 = vld [vmem:[%s4] sm:$0x3]
      %v1501 = vlaneseq
      %v1502 = vshrl.u32 %v1501, 7
      %v1503 = vsub.s32 0, %v1502
      %v1504 = vrot.slane %v1499, %v1503
      %v1505 = vlaneseq
      %v1506 = vshrl.u32 %v1505, 7
      %v1507 = vsub.s32 1, %v1506
      %v1508 = vrot.slane %v1499, %v1507
      %v1511 = vadd.f32 %v1495, %v1504
      %v1512 = vadd.f32 %v1496, %v1508
      %v1513 = vadd.f32 %v1497, %v1504
      %v1514 = vadd.f32 %v1498, %v1508
      %1515 = vst [vmem:[#allocation3] sm:$0xff] %v1511
      %1516 = vst [vmem:[#allocation3 + $0x8] sm:$0xff] %v1512
      %1517 = vst [vmem:[#allocation3 + $0x10] sm:$0xff] %v1513
      %1518 = vst [vmem:[#allocation3 + $0x18] sm:$0xff] %v1514
    $region29: #{tpu_custom_call.1} parent=1 // pred_fallthru
      _
    // Predicated region
    $region30: #{tpu_custom_call.1} parent=1 // pred_check
      _
    $region31: #{tpu_custom_call.1} parent=1 // pred_check_branch
      %1520 = sbr.rel (0) target = $region33
    $region32: #{tpu_custom_call.1} parent=1 // pred_region
      %s1522 = ssub.s32 512, 512
      %1523 = vsyncadd [#allocation4], %s1522
      %s1524 = sshll.u32 [#allocation3], 4
      %s1525 = int_to_ptr.vmem [resolvable:$true] %s1524
      %1530 = dma.vmem_to_hbm [thread:$0]  %s1525, 512, %s5, [#allocation4], 256, 256, 16
    $region33: #{tpu_custom_call.1} parent=1 // pred_fallthru
      _
    // Predicated region
    $region34: #{tpu_custom_call.1} parent=1 // pred_check
      _
    $region35: #{tpu_custom_call.1} parent=1 // pred_check_branch
      %1532 = sbr.rel (0) target = $region37
    $region36: #{tpu_custom_call.1} parent=1 // pred_region
      %1533 = dma.done [#allocation4], 512
    $region37: #{tpu_custom_call.1} parent=1 // pred_fallthru
      _
    %1534 = vsyncpa [#allocation4], 1

</llo_original>
